<compile_context>
chip_gen: v7x
topology: tpu7x:2x2x1
jax: 0.10.0
libtpu: 0.0.40
codegen_flags: <defaults>
</compile_context>

<pallas_src>
import functools
import math

import jax
import jax.numpy as jnp
import numpy as np
from jax import lax
from jax.experimental import pallas as pl
from jax.experimental.pallas import tpu as pltpu


# ----------------------------------------------------------------------------
# VMEM budgeting
# ----------------------------------------------------------------------------
def _vmem_budget():
    """Returns (block working-set budget, scoped-VMEM compiler limit) bytes.

    Sized against the physical VMEM of the current generation when it can be
    queried (v5e/v6e: 128 MiB, v7x: 64 MiB); falls back to the smallest (v7x)
    figure so the tiling is always safe.
    """
    phys = None
    try:
        phys = getattr(pltpu.get_tpu_info(), "vmem_capacity_bytes", None)
    except Exception:
        phys = None
    if not phys:
        phys = 64 * 1024 * 1024              # conservative (v7x per-core VMEM)
    limit = min((int(phys) * 3) // 4, 96 * 1024 * 1024)
    budget = (limit * 5) // 6
    return budget, limit


# ----------------------------------------------------------------------------
# tiling helpers
# ----------------------------------------------------------------------------
def _round_up(x, m):
    return ((x + m - 1) // m) * m


def _plan_dim(dim, cap, quantum):
    """Pick a block size for one axis -> (tile, padded_dim).

    Axes <= cap use a single full-extent block (always legal, always small).
    Larger axes first look for an exact divisor that is a multiple of
    `quantum`; if none exists the axis is padded up to a multiple of the
    cap-sized tile instead of falling back to a huge full-extent block.
    """
    if dim <= cap:
        return dim, dim
    t = (cap // quantum) * quantum
    tt = t
    while tt >= quantum:
        if dim % tt == 0:
            return tt, dim
        tt -= quantum
    return t, _round_up(dim, t)


def _pad2(x, rows, cols):
    r, c = x.shape
    if r == rows and c == cols:
        return x
    return jnp.pad(x, ((0, rows - r), (0, cols - c)))


# ----------------------------------------------------------------------------
# Projection kernels
# ----------------------------------------------------------------------------
def _linear_kernel_1pass(x_ref, w_ref, b_ref, o_ref):
    """Whole-K matmul in one pass (no accumulator, 2-D grid)."""
    o_ref[...] = (jnp.dot(x_ref[...], w_ref[...],
                          preferred_element_type=jnp.float32)
                  + b_ref[...]).astype(o_ref.dtype)


def _linear_kernel_acc(x_ref, w_ref, b_ref, o_ref, acc_ref):
    """K-tiled matmul (K innermost grid axis, f32 VMEM accumulator)."""
    @pl.when(pl.program_id(2) == 0)
    def _init():
        acc_ref[...] = jnp.zeros_like(acc_ref)

    acc_ref[...] += jnp.dot(x_ref[...], w_ref[...],
                            preferred_element_type=jnp.float32)

    @pl.when(pl.program_id(2) == pl.num_programs(2) - 1)
    def _finalize():
        o_ref[...] = (acc_ref[...] + b_ref[...]).astype(o_ref.dtype)


def _qkv_kernel_shared(x_ref, wq_ref, wk_ref, wv_ref, bq_ref, bk_ref, bv_ref,
                       oq_ref, ok_ref, ov_ref):
    """Fused Q/K/V projection, single shared activation block (self-attn)."""
    x = x_ref[...]
    for w_ref, b_ref, o_ref in ((wq_ref, bq_ref, oq_ref),
                                (wk_ref, bk_ref, ok_ref),
                                (wv_ref, bv_ref, ov_ref)):
        o_ref[...] = (jnp.dot(x, w_ref[...],
                              preferred_element_type=jnp.float32)
                      + b_ref[...]).astype(o_ref.dtype)


def _qkv_kernel(xq_ref, xk_ref, xv_ref, wq_ref, wk_ref, wv_ref,
                bq_ref, bk_ref, bv_ref, oq_ref, ok_ref, ov_ref):
    """Fused Q/K/V projection with distinct activations (cross-attn, T==S)."""
    for x_ref, w_ref, b_ref, o_ref in ((xq_ref, wq_ref, bq_ref, oq_ref),
                                       (xk_ref, wk_ref, bk_ref, ok_ref),
                                       (xv_ref, wv_ref, bv_ref, ov_ref)):
        o_ref[...] = (jnp.dot(x_ref[...], w_ref[...],
                              preferred_element_type=jnp.float32)
                      + b_ref[...]).astype(o_ref.dtype)


def linear(x2d, w, b, *, out_dtype):
    """y = x @ W + b, tiled & pipelined; pads awkward axes and slices back."""
    M, K = x2d.shape
    N = w.shape[1]
    _, limit = _vmem_budget()

    tm, Mp = _plan_dim(M, 512, 16 if M >= 16 else 8)   # bf16 sublane quantum
    tn, Np = _plan_dim(N, 512, 128)
    if K <= 2048:
        tk, Kp = K, K                                  # single K pass
    else:
        tk, Kp = _plan_dim(K, 512, 128)
    single_k = (tk == Kp)

    xp = _pad2(x2d, Mp, Kp)
    wp = _pad2(w, Kp, Np)
    bp = _pad2(b.reshape(1, N), 1, Np)

    if single_k:
        out = pl.pallas_call(
            _linear_kernel_1pass,
            out_shape=jax.ShapeDtypeStruct((Mp, Np), out_dtype),
            grid=(Mp // tm, Np // tn),
            in_specs=[
                pl.BlockSpec((tm, Kp), lambda i, j: (i, 0)),
                pl.BlockSpec((Kp, tn), lambda i, j: (0, j)),
                pl.BlockSpec((1, tn), lambda i, j: (0, j)),
            ],
            out_specs=pl.BlockSpec((tm, tn), lambda i, j: (i, j)),
            compiler_params=pltpu.CompilerParams(
                dimension_semantics=("parallel", "parallel"),
                vmem_limit_bytes=limit),
        )(xp, wp, bp)
    else:
        out = pl.pallas_call(
            _linear_kernel_acc,
            out_shape=jax.ShapeDtypeStruct((Mp, Np), out_dtype),
            grid=(Mp // tm, Np // tn, Kp // tk),
            in_specs=[
                pl.BlockSpec((tm, tk), lambda i, j, kk: (i, kk)),
                pl.BlockSpec((tk, tn), lambda i, j, kk: (kk, j)),
                pl.BlockSpec((1, tn), lambda i, j, kk: (0, j)),
            ],
            out_specs=pl.BlockSpec((tm, tn), lambda i, j, kk: (i, j)),
            scratch_shapes=[pltpu.VMEM((tm, tn), jnp.float32)],
            compiler_params=pltpu.CompilerParams(
                dimension_semantics=("parallel", "parallel", "arbitrary"),
                vmem_limit_bytes=limit),
        )(xp, wp, bp)

    if (Mp, Np) != (M, N):
        out = out[:M, :N]
    return out


def qkv_projection(q2d, k2d, v2d, wq, wk, wv, bq, bk, bv, *, out_dtype,
                   shared_x):
    """Fused Q/K/V projections (single pallas_call, single K pass).

    When `shared_x` the activation block is loaded once and reused for all
    three matmuls (3x less activation HBM traffic in self-attention).
    Caller guarantees T == S and K (= d_model) <= 2048.
    """
    M, K = q2d.shape
    N = wq.shape[1]
    _, limit = _vmem_budget()

    tm, Mp = _plan_dim(M, 512, 16 if M >= 16 else 8)
    tn, Np = _plan_dim(N, 512, 128)
    Kp = K

    wq, wk, wv = (_pad2(w, Kp, Np) for w in (wq, wk, wv))
    bq, bk, bv = (_pad2(bb.reshape(1, N), 1, Np) for bb in (bq, bk, bv))

    x_spec = pl.BlockSpec((tm, Kp), lambda i, j: (i, 0))
    w_spec = pl.BlockSpec((Kp, tn), lambda i, j: (0, j))
    b_spec = pl.BlockSpec((1, tn), lambda i, j: (0, j))
    o_spec = pl.BlockSpec((tm, tn), lambda i, j: (i, j))
    out_sds = jax.ShapeDtypeStruct((Mp, Np), out_dtype)
    cp = pltpu.CompilerParams(dimension_semantics=("parallel", "parallel"),
                              vmem_limit_bytes=limit)
    grid = (Mp // tm, Np // tn)

    if shared_x:
        x = _pad2(q2d, Mp, Kp)
        outs = pl.pallas_call(
            _qkv_kernel_shared,
            out_shape=(out_sds, out_sds, out_sds),
            grid=grid,
            in_specs=[x_spec, w_spec, w_spec, w_spec, b_spec, b_spec, b_spec],
            out_specs=(o_spec, o_spec, o_spec),
            compiler_params=cp,
        )(x, wq, wk, wv, bq, bk, bv)
    else:
        xq, xk, xv = (_pad2(x, Mp, Kp) for x in (q2d, k2d, v2d))
        outs = pl.pallas_call(
            _qkv_kernel,
            out_shape=(out_sds, out_sds, out_sds),
            grid=grid,
            in_specs=[x_spec, x_spec, x_spec, w_spec, w_spec, w_spec,
                      b_spec, b_spec, b_spec],
            out_specs=(o_spec, o_spec, o_spec),
            compiler_params=cp,
        )(xq, xk, xv, wq, wk, wv, bq, bk, bv)

    if (Mp, Np) != (M, N):
        outs = tuple(o[:M, :N] for o in outs)
    return outs


# ----------------------------------------------------------------------------
# Attention: (batch, head-tile, q-tile) block per grid step.  Heads stay
# packed on the lane axis of the projected activations (no JAX-level head
# transpose); heads are split in-kernel with static lane slices.
# ----------------------------------------------------------------------------
def _head_candidates(num_heads, d_head):
    """Legal head-tile sizes (descending).  Block lane width th*Dh must be a
    multiple of 128 or equal the full feature dim."""
    cands = []
    for th in range(num_heads, 0, -1):
        if num_heads % th:
            continue
        if th == num_heads or (th * d_head) % 128 == 0:
            cands.append(th)
    return cands


def _attn_plan(T, S, num_heads, d_head, masked, score_bytes, budget):
    """Pick (th, tq, padded_T) so the double-buffered working set fits VMEM."""
    cands = _head_candidates(num_heads, d_head)
    fitting = [th for th in cands if th * d_head <= 512]
    th = fitting[0] if fitting else cands[-1]

    q_quant = 16 if T >= 16 else 8          # bf16 sublane quantum when possible
    tq = min(256, _round_up(T, q_quant))

    def step_bytes(tq_, th_):
        b = 2 * tq_ * th_ * d_head * 2              # q block (bf16), 2 buffers
        b += 2 * 2 * S * th_ * d_head * 2           # full-S K and V blocks
        if masked:
            b += 2 * tq_ * S                        # int8 mask block
        b += 2 * th_ * tq_ * d_head * 2             # ctx output block (bf16)
        b += 2 * th_ * tq_ * S * score_bytes        # score output block
        return b

    while step_bytes(tq, th) > budget:
        if tq > q_quant:
            tq = max(q_quant, ((tq // 2) // q_quant) * q_quant)
            continue
        smaller = [c for c in cands if c < th]
        if smaller:
            th = smaller[0]
            continue
        # TODO(synk): for extremely long S even (tq=min, th=min) can exceed the
        # budget; an S-tiled variant would be needed, but the module contract
        # returns the full (B, H, T, S) softmax so the HBM footprint stays.
        break

    Tp = _round_up(T, tq)
    return th, tq, Tp


def _attn_kernel(q_ref, k_ref, v_ref, *rest, heads_per_block, d_head, scale,
                 masked):
    if masked:
        m_ref, ctx_ref, score_ref = rest
        # hoisted out of the head loop: one compare/select per block
        bias = jnp.where(m_ref[0] == 0, jnp.float32(-1e9), jnp.float32(0.0))
    else:
        ctx_ref, score_ref = rest

    q = q_ref[0]                               # (tq, th*Dh)
    k = k_ref[0]                               # (S,  th*Dh)
    v = v_ref[0]                               # (S,  th*Dh)

    for h in range(heads_per_block):           # static unroll over packed heads
        lo = h * d_head
        q_h = q[:, lo:lo + d_head]             # (tq, Dh)
        k_h = k[:, lo:lo + d_head]             # (S,  Dh)
        v_h = v[:, lo:lo + d_head]             # (S,  Dh)

        # scores = (q_h @ k_h^T) / sqrt(Dh); contraction on last axis of both.
        scores = lax.dot_general(
            q_h, k_h, (((1,), (1,)), ((), ())),
            preferred_element_type=jnp.float32) * scale        # (tq, S) f32
        if masked:
            scores = scores + bias

        # numerically stable softmax in f32; EXACT normalization because
        # `score` is part of the module's return contract.
        scores = scores - jnp.max(scores, axis=-1, keepdims=True)
        p = jnp.exp(scores)
        p = p / jnp.sum(p, axis=-1, keepdims=True)

        score_ref[0, h] = p.astype(score_ref.dtype)
        ctx_ref[0, h] = jnp.dot(p.astype(v_h.dtype), v_h,
                                preferred_element_type=jnp.float32
                                ).astype(ctx_ref.dtype)


def attention(qp, kp, vp, mask_i8, num_heads, d_head, *, score_dtype):
    B, T, D = qp.shape
    S = kp.shape[1]
    budget, limit = _vmem_budget()
    masked = mask_i8 is not None

    th, tq, Tp = _attn_plan(T, S, num_heads, d_head, masked,
                            jnp.dtype(score_dtype).itemsize, budget)

    if Tp != T:                               # pad query rows instead of a
        qp = jnp.pad(qp, ((0, 0), (0, Tp - T), (0, 0)))       # full-dim block
        if masked:
            mask_i8 = jnp.pad(mask_i8, ((0, 0), (0, Tp - T), (0, 0)))

    scale = 1.0 / math.sqrt(d_head)
    grid = (B, num_heads // th, Tp // tq)

    q_spec = pl.BlockSpec((1, tq, th * d_head), lambda b, ht, qt: (b, qt, ht))
    kv_spec = pl.BlockSpec((1, S, th * d_head), lambda b, ht, qt: (b, 0, ht))
    ctx_spec = pl.BlockSpec((1, th, tq, d_head), lambda b, ht, qt: (b, ht, qt, 0))
    score_spec = pl.BlockSpec((1, th, tq, S), lambda b, ht, qt: (b, ht, qt, 0))

    in_specs = [q_spec, kv_spec, kv_spec]
    args = [qp, kp, vp]
    if masked:
        in_specs.append(pl.BlockSpec((1, tq, S), lambda b, ht, qt: (b, qt, 0)))
        args.append(mask_i8)

    kernel = functools.partial(_attn_kernel, heads_per_block=th,
                               d_head=d_head, scale=scale, masked=masked)
    ctx, score = pl.pallas_call(
        kernel,
        out_shape=(
            jax.ShapeDtypeStruct((B, num_heads, Tp, d_head), qp.dtype),  # ctx
            jax.ShapeDtypeStruct((B, num_heads, Tp, S), score_dtype),    # score
        ),
        grid=grid,
        in_specs=in_specs,
        out_specs=(ctx_spec, score_spec),
        compiler_params=pltpu.CompilerParams(
            dimension_semantics=("parallel", "parallel", "parallel"),
            vmem_limit_bytes=limit),
    )(*args)

    if Tp != T:
        ctx = ctx[:, :, :T, :]
        score = score[:, :, :T, :]
    return ctx, score


# ----------------------------------------------------------------------------
# Full MHA forward
# ----------------------------------------------------------------------------
def mha_forward(params, q, k, v, mask=None, *, num_heads,
                compute_dtype=jnp.bfloat16, score_dtype=jnp.float32):
    """Forward pass of the reference MHA module.

    MXU operands (activations / weights / attention context) use
    `compute_dtype` (bf16 by default for MXU throughput on v5e/v6e/v7x);
    accumulation, bias add, softmax and the returned tensors stay float32.
    `score_dtype` can be set to bf16 to halve the dominant (B,H,T,S) score
    writeback if the caller tolerates it (default keeps f32 parity).
    """
    B, T, D = q.shape
    S = k.shape[1]
    assert D % num_heads == 0
    Dh = D // num_heads
    cd = compute_dtype

    shared_x = (q is k) and (k is v)          # self-attention: dedupe activation

    q2d = q.reshape(B * T, D).astype(cd)
    wq, wk, wv, wo = (params[n].astype(cd) for n in ("wq", "wk", "wv", "wo"))
    bq, bk, bv, bo = (params[n] for n in ("bq", "bk", "bv", "bo"))  # f32

    if T == S and D <= 2048:  # fused single-call, single-K-pass QKV projection
        if shared_x:
            qp, kp, vp = qkv_projection(q2d, q2d, q2d, wq, wk, wv, bq, bk, bv,
                                        out_dtype=cd, shared_x=True)
        else:
            k2d = k.reshape(B * S, D).astype(cd)
            v2d = v.reshape(B * S, D).astype(cd)
            qp, kp, vp = qkv_projection(q2d, k2d, v2d, wq, wk, wv, bq, bk, bv,
                                        out_dtype=cd, shared_x=False)
    else:                     # fallback: separate (still tiled) projections
        k2d = k.reshape(B * S, D).astype(cd)
        v2d = v.reshape(B * S, D).astype(cd)
        qp = linear(q2d, wq, bq, out_dtype=cd)
        kp = linear(k2d, wk, bk, out_dtype=cd)
        vp = linear(v2d, wv, bv, out_dtype=cd)

    # Keep heads packed along the feature axis (no JAX-level head transpose;
    # the attention kernel splits heads with lane slices).
    qp = qp.reshape(B, T, D)
    kp = kp.reshape(B, S, D)
    vp = vp.reshape(B, S, D)

    if mask is None:
        mask_i8 = None                            # specialized no-mask kernel
    else:
        # reference: masked_fill(mask == 0, -1e9); int8 mask = 4x less HBM.
        mask_i8 = (jnp.broadcast_to(mask, (B, T, S)) != 0).astype(jnp.int8)

    ctx, score = attention(qp, kp, vp, mask_i8, num_heads, Dh,
                           score_dtype=score_dtype)

    # Reproduce torch's `.contiguous().view(b, -1, d_model)` applied to the
    # (B, H, T, Dh) context (no head transpose back -- intentional, matches
    # the reference exactly).
    out2d = ctx.reshape(B * T, D)
    out = linear(out2d, wo, bo, out_dtype=jnp.float32).reshape(B, T, D)
    return out, score


def init_params(key, d_model):
    ks = jax.random.split(key, 8)
    bound = 1.0 / math.sqrt(d_model)

    def w(k):
        return jax.random.uniform(k, (d_model, d_model), jnp.float32, -bound, bound)

    def b(k):
        return jax.random.uniform(k, (d_model,), jnp.float32, -bound, bound)

    return {
        "wq": w(ks[0]), "bq": b(ks[1]),
        "wk": w(ks[2]), "bk": b(ks[3]),
        "wv": w(ks[4]), "bv": b(ks[5]),
        "wo": w(ks[6]), "bo": b(ks[7]),
    }


# Plain-JAX f32 reference (mirrors the PyTorch module) for sanity checks.
def mha_reference(params, q, k, v, mask, num_heads):
    B, T, D = q.shape
    S = k.shape[1]
    Dh = D // num_heads

    def lin(x, w, b):
        return jnp.einsum("bsd,de->bse", x, w) + b

    qp = lin(q, params["wq"], params["bq"]).reshape(B, T, num_heads, Dh).transpose(0, 2, 1, 3)
    kp = lin(k, params["wk"], params["bk"]).reshape(B, S, num_heads, Dh).transpose(0, 2, 1, 3)
    vp = lin(v, params["wv"], params["bv"]).reshape(B, S, num_heads, Dh).transpose(0, 2, 1, 3)
    scores = jnp.einsum("bhtd,bhsd->bhts", qp, kp) / math.sqrt(Dh)
    if mask is not None:
        scores = jnp.where(mask[:, None] == 0, -1e9, scores)
    score = jax.nn.softmax(scores, axis=-1)
    ctx = jnp.einsum("bhts,bhsd->bhtd", score, vp)
    out = lin(ctx.reshape(B, -1, D), params["wo"], params["bo"])
    return out, score


if __name__ == "__main__":
    B, T, S, D, H = 2, 8, 8, 32, 4

    key = jax.random.PRNGKey(0)
    kq, kk, kv, kp_, km = jax.random.split(key, 5)
    q = jax.random.normal(kq, (B, T, D), jnp.float32)
    k = jax.random.normal(kk, (B, S, D), jnp.float32)
    v = jax.random.normal(kv, (B, S, D), jnp.float32)
    params = init_params(kp_, D)

    fwd = jax.jit(functools.partial(mha_forward, num_heads=H))

    # 1) cross-attention, no mask (fused QKV, specialized no-mask kernel)
    out, score = fwd(params, q, k, v)
    jax.block_until_ready((out, score))
    assert out.shape == (B, T, D) and out.dtype == jnp.float32
    assert score.shape == (B, H, T, S) and score.dtype == jnp.float32
    ref_out, ref_score = mha_reference(params, q, k, v, None, H)
    np.testing.assert_allclose(np.asarray(out), np.asarray(ref_out), atol=0.15, rtol=0.1)
    np.testing.assert_allclose(np.asarray(score), np.asarray(ref_score), atol=0.08, rtol=0.1)

    # 2) masked path (int8 mask, hoisted additive bias)
    mask = (jax.random.uniform(km, (B, T, S)) > 0.25).astype(jnp.float32)
    out_m, score_m = fwd(params, q, k, v, mask)
    jax.block_until_ready((out_m, score_m))
    ref_out_m, ref_score_m = mha_reference(params, q, k, v, mask, H)
    np.testing.assert_allclose(np.asarray(out_m), np.asarray(ref_out_m), atol=0.15, rtol=0.1)
    np.testing.assert_allclose(np.asarray(score_m), np.asarray(ref_score_m), atol=0.08, rtol=0.1)

    # 3) self-attention (shared activation dedupe inside the fused QKV call)
    fwd_self = jax.jit(lambda p, x: mha_forward(p, x, x, x, num_heads=H))
    out_s, score_s = fwd_self(params, q)
    jax.block_until_ready((out_s, score_s))
    ref_out_s, ref_score_s = mha_reference(params, q, q, q, None, H)
    np.testing.assert_allclose(np.asarray(out_s), np.asarray(ref_out_s), atol=0.15, rtol=0.1)
    np.testing.assert_allclose(np.asarray(score_s), np.asarray(ref_score_s), atol=0.08, rtol=0.1)

    # 4) awkward T (exercises the pad-and-slice path: T=10 -> padded q tile)
    T2 = 10
    q2 = jax.random.normal(kq, (B, T2, D), jnp.float32)
    mask2 = (jax.random.uniform(km, (B, T2, S)) > 0.25).astype(jnp.float32)
    out2, score2 = fwd(params, q2, k, v, mask2)
    jax.block_until_ready((out2, score2))
    assert out2.shape == (B, T2, D) and score2.shape == (B, H, T2, S)
    ref_out2, ref_score2 = mha_reference(params, q2, k, v, mask2, H)
    np.testing.assert_allclose(np.asarray(out2), np.asarray(ref_out2), atol=0.15, rtol=0.1)
    np.testing.assert_allclose(np.asarray(score2), np.asarray(ref_score2), atol=0.08, rtol=0.1)

    print("KERNEL_OK")
</pallas_src>

<mosaic_0001>
module attributes {stable_mosaic.version = 11 : i64} {
  func.func @_qkv_kernel(%arg0: i32, %arg1: i32, %arg2: memref<16x32xbf16, #tpu.memory_space<vmem>>, %arg3: memref<16x32xbf16, #tpu.memory_space<vmem>>, %arg4: memref<16x32xbf16, #tpu.memory_space<vmem>>, %arg5: memref<32x32xbf16, #tpu.memory_space<vmem>>, %arg6: memref<32x32xbf16, #tpu.memory_space<vmem>>, %arg7: memref<32x32xbf16, #tpu.memory_space<vmem>>, %arg8: memref<1x32xf32, #tpu.memory_space<vmem>>, %arg9: memref<1x32xf32, #tpu.memory_space<vmem>>, %arg10: memref<1x32xf32, #tpu.memory_space<vmem>>, %arg11: memref<16x32xbf16, #tpu.memory_space<vmem>>, %arg12: memref<16x32xbf16, #tpu.memory_space<vmem>>, %arg13: memref<16x32xbf16, #tpu.memory_space<vmem>>) attributes {dimension_semantics = [#tpu.dimension_semantics<parallel>, #tpu.dimension_semantics<parallel>], iteration_bounds = array<i64: 1, 1>, scalar_prefetch = 0 : i64, scratch_operands = 0 : i64, tpu.core_type = #tpu.core_type<tc>, window_params = [{transform_indices = @transform_0, window_bounds = array<i64: 16, 32>}, {transform_indices = @transform_1, window_bounds = array<i64: 16, 32>}, {transform_indices = @transform_2, window_bounds = array<i64: 16, 32>}, {transform_indices = @transform_3, window_bounds = array<i64: 32, 32>}, {transform_indices = @transform_4, window_bounds = array<i64: 32, 32>}, {transform_indices = @transform_5, window_bounds = array<i64: 32, 32>}, {transform_indices = @transform_6, window_bounds = array<i64: 1, 32>}, {transform_indices = @transform_7, window_bounds = array<i64: 1, 32>}, {transform_indices = @transform_8, window_bounds = array<i64: 1, 32>}, {transform_indices = @transform_9, window_bounds = array<i64: 16, 32>}, {transform_indices = @transform_10, window_bounds = array<i64: 16, 32>}, {transform_indices = @transform_11, window_bounds = array<i64: 16, 32>}]} {
    %c0 = arith.constant 0 : index
    %c0_0 = arith.constant 0 : index
    %0 = vector.load %arg2[%c0, %c0_0] : memref<16x32xbf16, #tpu.memory_space<vmem>>, vector<16x32xbf16>
    %c0_1 = arith.constant 0 : index
    %c0_2 = arith.constant 0 : index
    %1 = vector.load %arg5[%c0_1, %c0_2] : memref<32x32xbf16, #tpu.memory_space<vmem>>, vector<32x32xbf16>
    %cst = arith.constant dense<0.000000e+00> : vector<16x32xf32>
    %2 = tpu.matmul %0, %1, %cst {dimension_numbers = #tpu.dot_dimension_numbers<[1], [0], [0], [1], [0, 0, 1, 1], [], []>} : vector<16x32xbf16>, vector<32x32xbf16>, vector<16x32xf32> -> vector<16x32xf32>
    %c0_3 = arith.constant 0 : index
    %c0_4 = arith.constant 0 : index
    %3 = vector.load %arg8[%c0_3, %c0_4] : memref<1x32xf32, #tpu.memory_space<vmem>>, vector<1x32xf32>
    %4 = vector.broadcast %3 : vector<1x32xf32> to vector<16x32xf32>
    %5 = arith.addf %2, %4 : vector<16x32xf32>
    %6 = arith.truncf %5 : vector<16x32xf32> to vector<16x32xbf16>
    %c0_5 = arith.constant 0 : index
    %c0_6 = arith.constant 0 : index
    %7 = vector.load %arg11[%c0_5, %c0_6] : memref<16x32xbf16, #tpu.memory_space<vmem>>, vector<16x32xbf16>
    tpu.vector_store %arg11[%c0_5, %c0_6], %6 {strides = array<i32>} : memref<16x32xbf16, #tpu.memory_space<vmem>>, vector<16x32xbf16>,
    %c0_7 = arith.constant 0 : index
    %c0_8 = arith.constant 0 : index
    %8 = vector.load %arg3[%c0_7, %c0_8] : memref<16x32xbf16, #tpu.memory_space<vmem>>, vector<16x32xbf16>
    %c0_9 = arith.constant 0 : index
    %c0_10 = arith.constant 0 : index
    %9 = vector.load %arg6[%c0_9, %c0_10] : memref<32x32xbf16, #tpu.memory_space<vmem>>, vector<32x32xbf16>
    %cst_11 = arith.constant dense<0.000000e+00> : vector<16x32xf32>
    %10 = tpu.matmul %8, %9, %cst_11 {dimension_numbers = #tpu.dot_dimension_numbers<[1], [0], [0], [1], [0, 0, 1, 1], [], []>} : vector<16x32xbf16>, vector<32x32xbf16>, vector<16x32xf32> -> vector<16x32xf32>
    %c0_12 = arith.constant 0 : index
    %c0_13 = arith.constant 0 : index
    %11 = vector.load %arg9[%c0_12, %c0_13] : memref<1x32xf32, #tpu.memory_space<vmem>>, vector<1x32xf32>
    %12 = vector.broadcast %11 : vector<1x32xf32> to vector<16x32xf32>
    %13 = arith.addf %10, %12 : vector<16x32xf32>
    %14 = arith.truncf %13 : vector<16x32xf32> to vector<16x32xbf16>
    %c0_14 = arith.constant 0 : index
    %c0_15 = arith.constant 0 : index
    %15 = vector.load %arg12[%c0_14, %c0_15] : memref<16x32xbf16, #tpu.memory_space<vmem>>, vector<16x32xbf16>
    tpu.vector_store %arg12[%c0_14, %c0_15], %14 {strides = array<i32>} : memref<16x32xbf16, #tpu.memory_space<vmem>>, vector<16x32xbf16>,
    %c0_16 = arith.constant 0 : index
    %c0_17 = arith.constant 0 : index
    %16 = vector.load %arg4[%c0_16, %c0_17] : memref<16x32xbf16, #tpu.memory_space<vmem>>, vector<16x32xbf16>
    %c0_18 = arith.constant 0 : index
    %c0_19 = arith.constant 0 : index
    %17 = vector.load %arg7[%c0_18, %c0_19] : memref<32x32xbf16, #tpu.memory_space<vmem>>, vector<32x32xbf16>
    %cst_20 = arith.constant dense<0.000000e+00> : vector<16x32xf32>
    %18 = tpu.matmul %16, %17, %cst_20 {dimension_numbers = #tpu.dot_dimension_numbers<[1], [0], [0], [1], [0, 0, 1, 1], [], []>} : vector<16x32xbf16>, vector<32x32xbf16>, vector<16x32xf32> -> vector<16x32xf32>
    %c0_21 = arith.constant 0 : index
    %c0_22 = arith.constant 0 : index
    %19 = vector.load %arg10[%c0_21, %c0_22] : memref<1x32xf32, #tpu.memory_space<vmem>>, vector<1x32xf32>
    %20 = vector.broadcast %19 : vector<1x32xf32> to vector<16x32xf32>
    %21 = arith.addf %18, %20 : vector<16x32xf32>
    %22 = arith.truncf %21 : vector<16x32xf32> to vector<16x32xbf16>
    %c0_23 = arith.constant 0 : index
    %c0_24 = arith.constant 0 : index
    %23 = vector.load %arg13[%c0_23, %c0_24] : memref<16x32xbf16, #tpu.memory_space<vmem>>, vector<16x32xbf16>
    tpu.vector_store %arg13[%c0_23, %c0_24], %22 {strides = array<i32>} : memref<16x32xbf16, #tpu.memory_space<vmem>>, vector<16x32xbf16>,
    return
  }
  func.func @transform_0(%arg0: i32, %arg1: i32) -> (i32, i32) {
    %c0_i32 = arith.constant 0 : i32
    %c0_i32_0 = arith.constant 0 : i32
    return %arg0, %c0_i32 : i32, i32
  }
  func.func @transform_1(%arg0: i32, %arg1: i32) -> (i32, i32) {
    %c0_i32 = arith.constant 0 : i32
    %c0_i32_0 = arith.constant 0 : i32
    return %arg0, %c0_i32 : i32, i32
  }
  func.func @transform_2(%arg0: i32, %arg1: i32) -> (i32, i32) {
    %c0_i32 = arith.constant 0 : i32
    %c0_i32_0 = arith.constant 0 : i32
    return %arg0, %c0_i32 : i32, i32
  }
  func.func @transform_3(%arg0: i32, %arg1: i32) -> (i32, i32) {
    %c0_i32 = arith.constant 0 : i32
    %c0_i32_0 = arith.constant 0 : i32
    return %c0_i32, %arg1 : i32, i32
  }
  func.func @transform_4(%arg0: i32, %arg1: i32) -> (i32, i32) {
    %c0_i32 = arith.constant 0 : i32
    %c0_i32_0 = arith.constant 0 : i32
    return %c0_i32, %arg1 : i32, i32
  }
  func.func @transform_5(%arg0: i32, %arg1: i32) -> (i32, i32) {
    %c0_i32 = arith.constant 0 : i32
    %c0_i32_0 = arith.constant 0 : i32
    return %c0_i32, %arg1 : i32, i32
  }
  func.func @transform_6(%arg0: i32, %arg1: i32) -> (i32, i32) {
    %c0_i32 = arith.constant 0 : i32
    %c0_i32_0 = arith.constant 0 : i32
    return %c0_i32, %arg1 : i32, i32
  }
  func.func @transform_7(%arg0: i32, %arg1: i32) -> (i32, i32) {
    %c0_i32 = arith.constant 0 : i32
    %c0_i32_0 = arith.constant 0 : i32
    return %c0_i32, %arg1 : i32, i32
  }
  func.func @transform_8(%arg0: i32, %arg1: i32) -> (i32, i32) {
    %c0_i32 = arith.constant 0 : i32
    %c0_i32_0 = arith.constant 0 : i32
    return %c0_i32, %arg1 : i32, i32
  }
  func.func @transform_9(%arg0: i32, %arg1: i32) -> (i32, i32) {
    %c0_i32 = arith.constant 0 : i32
    return %arg0, %arg1 : i32, i32
  }
  func.func @transform_10(%arg0: i32, %arg1: i32) -> (i32, i32) {
    %c0_i32 = arith.constant 0 : i32
    return %arg0, %arg1 : i32, i32
  }
  func.func @transform_11(%arg0: i32, %arg1: i32) -> (i32, i32) {
    %c0_i32 = arith.constant 0 : i32
    return %arg0, %arg1 : i32, i32
  }
}

module attributes {stable_mosaic.version = 11 : i64} {
  func.func @_linear_kernel_1pass(%arg0: i32, %arg1: i32, %arg2: memref<16x32xbf16, #tpu.memory_space<vmem>>, %arg3: memref<32x32xbf16, #tpu.memory_space<vmem>>, %arg4: memref<1x32xf32, #tpu.memory_space<vmem>>, %arg5: memref<16x32xf32, #tpu.memory_space<vmem>>) attributes {dimension_semantics = [#tpu.dimension_semantics<parallel>, #tpu.dimension_semantics<parallel>], iteration_bounds = array<i64: 1, 1>, scalar_prefetch = 0 : i64, scratch_operands = 0 : i64, tpu.core_type = #tpu.core_type<tc>, window_params = [{transform_indices = @transform_0, window_bounds = array<i64: 16, 32>}, {transform_indices = @transform_1, window_bounds = array<i64: 32, 32>}, {transform_indices = @transform_2, window_bounds = array<i64: 1, 32>}, {transform_indices = @transform_3, window_bounds = array<i64: 16, 32>}]} {
    %c0 = arith.constant 0 : index
    %c0_0 = arith.constant 0 : index
    %0 = vector.load %arg2[%c0, %c0_0] : memref<16x32xbf16, #tpu.memory_space<vmem>>, vector<16x32xbf16>
    %c0_1 = arith.constant 0 : index
    %c0_2 = arith.constant 0 : index
    %1 = vector.load %arg3[%c0_1, %c0_2] : memref<32x32xbf16, #tpu.memory_space<vmem>>, vector<32x32xbf16>
    %cst = arith.constant dense<0.000000e+00> : vector<16x32xf32>
    %2 = tpu.matmul %0, %1, %cst {dimension_numbers = #tpu.dot_dimension_numbers<[1], [0], [0], [1], [0, 0, 1, 1], [], []>} : vector<16x32xbf16>, vector<32x32xbf16>, vector<16x32xf32> -> vector<16x32xf32>
    %c0_3 = arith.constant 0 : index
    %c0_4 = arith.constant 0 : index
    %3 = vector.load %arg4[%c0_3, %c0_4] : memref<1x32xf32, #tpu.memory_space<vmem>>, vector<1x32xf32>
    %4 = vector.broadcast %3 : vector<1x32xf32> to vector<16x32xf32>
    %5 = arith.addf %2, %4 : vector<16x32xf32>
    %c0_5 = arith.constant 0 : index
    %c0_6 = arith.constant 0 : index
    %6 = vector.load %arg5[%c0_5, %c0_6] : memref<16x32xf32, #tpu.memory_space<vmem>>, vector<16x32xf32>
    tpu.vector_store %arg5[%c0_5, %c0_6], %5 {strides = array<i32>} : memref<16x32xf32, #tpu.memory_space<vmem>>, vector<16x32xf32>,
    return
  }
  func.func @transform_0(%arg0: i32, %arg1: i32) -> (i32, i32) {
    %c0_i32 = arith.constant 0 : i32
    %c0_i32_0 = arith.constant 0 : i32
    return %arg0, %c0_i32 : i32, i32
  }
  func.func @transform_1(%arg0: i32, %arg1: i32) -> (i32, i32) {
    %c0_i32 = arith.constant 0 : i32
    %c0_i32_0 = arith.constant 0 : i32
    return %c0_i32, %arg1 : i32, i32
  }
  func.func @transform_2(%arg0: i32, %arg1: i32) -> (i32, i32) {
    %c0_i32 = arith.constant 0 : i32
    %c0_i32_0 = arith.constant 0 : i32
    return %c0_i32, %arg1 : i32, i32
  }
  func.func @transform_3(%arg0: i32, %arg1: i32) -> (i32, i32) {
    %c0_i32 = arith.constant 0 : i32
    return %arg0, %arg1 : i32, i32
  }
}

module attributes {stable_mosaic.version = 11 : i64} {
  func.func @_attn_kernel(%arg0: i32, %arg1: i32, %arg2: i32, %arg3: memref<1x8x32xbf16, #tpu.memory_space<vmem>>, %arg4: memref<1x8x32xbf16, #tpu.memory_space<vmem>>, %arg5: memref<1x8x32xbf16, #tpu.memory_space<vmem>>, %arg6: memref<1x4x8x8xbf16, #tpu.memory_space<vmem>>, %arg7: memref<1x4x8x8xf32, #tpu.memory_space<vmem>>) attributes {dimension_semantics = [#tpu.dimension_semantics<parallel>, #tpu.dimension_semantics<parallel>, #tpu.dimension_semantics<parallel>], iteration_bounds = array<i64: 2, 1, 1>, scalar_prefetch = 0 : i64, scratch_operands = 0 : i64, tpu.core_type = #tpu.core_type<tc>, window_params = [{transform_indices = @transform_0, window_bounds = array<i64: 1, 8, 32>}, {transform_indices = @transform_1, window_bounds = array<i64: 1, 8, 32>}, {transform_indices = @transform_2, window_bounds = array<i64: 1, 8, 32>}, {transform_indices = @transform_3, window_bounds = array<i64: 1, 4, 8, 8>}, {transform_indices = @transform_4, window_bounds = array<i64: 1, 4, 8, 8>}]} {
    %c0 = arith.constant 0 : index
    %c0_0 = arith.constant 0 : index
    %c0_1 = arith.constant 0 : index
    %0 = vector.load %arg3[%c0, %c0_0, %c0_1] : memref<1x8x32xbf16, #tpu.memory_space<vmem>>, vector<1x8x32xbf16>
    %1 = vector.shape_cast %0 : vector<1x8x32xbf16> to vector<8x32xbf16>
    %c0_2 = arith.constant 0 : index
    %c0_3 = arith.constant 0 : index
    %c0_4 = arith.constant 0 : index
    %2 = vector.load %arg4[%c0_2, %c0_3, %c0_4] : memref<1x8x32xbf16, #tpu.memory_space<vmem>>, vector<1x8x32xbf16>
    %3 = vector.shape_cast %2 : vector<1x8x32xbf16> to vector<8x32xbf16>
    %c0_5 = arith.constant 0 : index
    %c0_6 = arith.constant 0 : index
    %c0_7 = arith.constant 0 : index
    %4 = vector.load %arg5[%c0_5, %c0_6, %c0_7] : memref<1x8x32xbf16, #tpu.memory_space<vmem>>, vector<1x8x32xbf16>
    %5 = vector.shape_cast %4 : vector<1x8x32xbf16> to vector<8x32xbf16>
    %6 = vector.extract_strided_slice %1 {offsets = [0, 0], sizes = [8, 8], strides = [1, 1]} : vector<8x32xbf16> to vector<8x8xbf16>
    %7 = vector.extract_strided_slice %3 {offsets = [0, 0], sizes = [8, 8], strides = [1, 1]} : vector<8x32xbf16> to vector<8x8xbf16>
    %8 = vector.extract_strided_slice %5 {offsets = [0, 0], sizes = [8, 8], strides = [1, 1]} : vector<8x32xbf16> to vector<8x8xbf16>
    %cst = arith.constant dense<0.000000e+00> : vector<8x8xf32>
    %9 = tpu.matmul %6, %7, %cst {dimension_numbers = #tpu.dot_dimension_numbers<[1], [1], [0], [0], [0, 0, 1, 0], [], []>} : vector<8x8xbf16>, vector<8x8xbf16>, vector<8x8xf32> -> vector<8x8xf32>
    %cst_8 = arith.constant 0.353553385 : f32
    %10 = vector.broadcast %cst_8 : f32 to vector<8x8xf32>
    %11 = arith.mulf %9, %10 : vector<8x8xf32>
    %cst_9 = arith.constant dense<0xFF800000> : vector<8xf32>
    %12 = vector.multi_reduction <maximumf>, %11, %cst_9 [1] : vector<8x8xf32> to vector<8xf32>
    %13 = vector.shape_cast %12 : vector<8xf32> to vector<8x1xf32>
    %14 = vector.broadcast %13 : vector<8x1xf32> to vector<8x8xf32>
    %15 = arith.subf %11, %14 : vector<8x8xf32>
    %16 = math.exp %15 : vector<8x8xf32>
    %cst_10 = arith.constant dense<0.000000e+00> : vector<8xf32>
    %17 = vector.multi_reduction <add>, %16, %cst_10 [1] : vector<8x8xf32> to vector<8xf32>
    %18 = vector.shape_cast %17 : vector<8xf32> to vector<8x1xf32>
    %19 = vector.broadcast %18 : vector<8x1xf32> to vector<8x8xf32>
    %20 = arith.divf %16, %19 : vector<8x8xf32>
    %c0_11 = arith.constant 0 : index
    %c0_12 = arith.constant 0 : index
    %c0_13 = arith.constant 0 : index
    %c0_14 = arith.constant 0 : index
    %21 = vector.load %arg7[%c0_11, %c0_12, %c0_13, %c0_14] : memref<1x4x8x8xf32, #tpu.memory_space<vmem>>, vector<1x1x8x8xf32>
    %22 = vector.shape_cast %21 : vector<1x1x8x8xf32> to vector<8x8xf32>
    %23 = vector.shape_cast %20 : vector<8x8xf32> to vector<1x1x8x8xf32>
    tpu.vector_store %arg7[%c0_11, %c0_12, %c0_13, %c0_14], %23 {strides = array<i32>} : memref<1x4x8x8xf32, #tpu.memory_space<vmem>>, vector<1x1x8x8xf32>,
    %24 = arith.truncf %20 : vector<8x8xf32> to vector<8x8xbf16>
    %cst_15 = arith.constant dense<0.000000e+00> : vector<8x8xf32>
    %25 = tpu.matmul %24, %8, %cst_15 {dimension_numbers = #tpu.dot_dimension_numbers<[1], [0], [0], [1], [0, 0, 1, 1], [], []>} : vector<8x8xbf16>, vector<8x8xbf16>, vector<8x8xf32> -> vector<8x8xf32>
    %26 = arith.truncf %25 : vector<8x8xf32> to vector<8x8xbf16>
    %c0_16 = arith.constant 0 : index
    %c0_17 = arith.constant 0 : index
    %c0_18 = arith.constant 0 : index
    %c0_19 = arith.constant 0 : index
    %27 = vector.load %arg6[%c0_16, %c0_17, %c0_18, %c0_19] : memref<1x4x8x8xbf16, #tpu.memory_space<vmem>>, vector<1x1x8x8xbf16>
    %28 = vector.shape_cast %27 : vector<1x1x8x8xbf16> to vector<8x8xbf16>
    %29 = vector.shape_cast %26 : vector<8x8xbf16> to vector<1x1x8x8xbf16>
    tpu.vector_store %arg6[%c0_16, %c0_17, %c0_18, %c0_19], %29 {strides = array<i32>} : memref<1x4x8x8xbf16, #tpu.memory_space<vmem>>, vector<1x1x8x8xbf16>,
    %30 = vector.extract_strided_slice %1 {offsets = [0, 8], sizes = [8, 8], strides = [1, 1]} : vector<8x32xbf16> to vector<8x8xbf16>
    %31 = vector.extract_strided_slice %3 {offsets = [0, 8], sizes = [8, 8], strides = [1, 1]} : vector<8x32xbf16> to vector<8x8xbf16>
    %32 = vector.extract_strided_slice %5 {offsets = [0, 8], sizes = [8, 8], strides = [1, 1]} : vector<8x32xbf16> to vector<8x8xbf16>
    %cst_20 = arith.constant dense<0.000000e+00> : vector<8x8xf32>
    %33 = tpu.matmul %30, %31, %cst_20 {dimension_numbers = #tpu.dot_dimension_numbers<[1], [1], [0], [0], [0, 0, 1, 0], [], []>} : vector<8x8xbf16>, vector<8x8xbf16>, vector<8x8xf32> -> vector<8x8xf32>
    %cst_21 = arith.constant 0.353553385 : f32
    %34 = vector.broadcast %cst_21 : f32 to vector<8x8xf32>
    %35 = arith.mulf %33, %34 : vector<8x8xf32>
    %cst_22 = arith.constant dense<0xFF800000> : vector<8xf32>
    %36 = vector.multi_reduction <maximumf>, %35, %cst_22 [1] : vector<8x8xf32> to vector<8xf32>
    %37 = vector.shape_cast %36 : vector<8xf32> to vector<8x1xf32>
    %38 = vector.broadcast %37 : vector<8x1xf32> to vector<8x8xf32>
    %39 = arith.subf %35, %38 : vector<8x8xf32>
    %40 = math.exp %39 : vector<8x8xf32>
    %cst_23 = arith.constant dense<0.000000e+00> : vector<8xf32>
    %41 = vector.multi_reduction <add>, %40, %cst_23 [1] : vector<8x8xf32> to vector<8xf32>
    %42 = vector.shape_cast %41 : vector<8xf32> to vector<8x1xf32>
    %43 = vector.broadcast %42 : vector<8x1xf32> to vector<8x8xf32>
    %44 = arith.divf %40, %43 : vector<8x8xf32>
    %c0_24 = arith.constant 0 : index
    %c1 = arith.constant 1 : index
    %c0_25 = arith.constant 0 : index
    %c0_26 = arith.constant 0 : index
    %45 = vector.load %arg7[%c0_24, %c1, %c0_25, %c0_26] : memref<1x4x8x8xf32, #tpu.memory_space<vmem>>, vector<1x1x8x8xf32>
    %46 = vector.shape_cast %45 : vector<1x1x8x8xf32> to vector<8x8xf32>
    %47 = vector.shape_cast %44 : vector<8x8xf32> to vector<1x1x8x8xf32>
    tpu.vector_store %arg7[%c0_24, %c1, %c0_25, %c0_26], %47 {strides = array<i32>} : memref<1x4x8x8xf32, #tpu.memory_space<vmem>>, vector<1x1x8x8xf32>,
    %48 = arith.truncf %44 : vector<8x8xf32> to vector<8x8xbf16>
    %cst_27 = arith.constant dense<0.000000e+00> : vector<8x8xf32>
    %49 = tpu.matmul %48, %32, %cst_27 {dimension_numbers = #tpu.dot_dimension_numbers<[1], [0], [0], [1], [0, 0, 1, 1], [], []>} : vector<8x8xbf16>, vector<8x8xbf16>, vector<8x8xf32> -> vector<8x8xf32>
    %50 = arith.truncf %49 : vector<8x8xf32> to vector<8x8xbf16>
    %c0_28 = arith.constant 0 : index
    %c1_29 = arith.constant 1 : index
    %c0_30 = arith.constant 0 : index
    %c0_31 = arith.constant 0 : index
    %51 = vector.load %arg6[%c0_28, %c1_29, %c0_30, %c0_31] : memref<1x4x8x8xbf16, #tpu.memory_space<vmem>>, vector<1x1x8x8xbf16>
    %52 = vector.shape_cast %51 : vector<1x1x8x8xbf16> to vector<8x8xbf16>
    %53 = vector.shape_cast %50 : vector<8x8xbf16> to vector<1x1x8x8xbf16>
    tpu.vector_store %arg6[%c0_28, %c1_29, %c0_30, %c0_31], %53 {strides = array<i32>} : memref<1x4x8x8xbf16, #tpu.memory_space<vmem>>, vector<1x1x8x8xbf16>,
    %54 = vector.extract_strided_slice %1 {offsets = [0, 16], sizes = [8, 8], strides = [1, 1]} : vector<8x32xbf16> to vector<8x8xbf16>
    %55 = vector.extract_strided_slice %3 {offsets = [0, 16], sizes = [8, 8], strides = [1, 1]} : vector<8x32xbf16> to vector<8x8xbf16>
    %56 = vector.extract_strided_slice %5 {offsets = [0, 16], sizes = [8, 8], strides = [1, 1]} : vector<8x32xbf16> to vector<8x8xbf16>
    %cst_32 = arith.constant dense<0.000000e+00> : vector<8x8xf32>
    %57 = tpu.matmul %54, %55, %cst_32 {dimension_numbers = #tpu.dot_dimension_numbers<[1], [1], [0], [0], [0, 0, 1, 0], [], []>} : vector<8x8xbf16>, vector<8x8xbf16>, vector<8x8xf32> -> vector<8x8xf32>
    %cst_33 = arith.constant 0.353553385 : f32
    %58 = vector.broadcast %cst_33 : f32 to vector<8x8xf32>
    %59 = arith.mulf %57, %58 : vector<8x8xf32>
    %cst_34 = arith.constant dense<0xFF800000> : vector<8xf32>
    %60 = vector.multi_reduction <maximumf>, %59, %cst_34 [1] : vector<8x8xf32> to vector<8xf32>
    %61 = vector.shape_cast %60 : vector<8xf32> to vector<8x1xf32>
    %62 = vector.broadcast %61 : vector<8x1xf32> to vector<8x8xf32>
    %63 = arith.subf %59, %62 : vector<8x8xf32>
    %64 = math.exp %63 : vector<8x8xf32>
    %cst_35 = arith.constant dense<0.000000e+00> : vector<8xf32>
    %65 = vector.multi_reduction <add>, %64, %cst_35 [1] : vector<8x8xf32> to vector<8xf32>
    %66 = vector.shape_cast %65 : vector<8xf32> to vector<8x1xf32>
    %67 = vector.broadcast %66 : vector<8x1xf32> to vector<8x8xf32>
    %68 = arith.divf %64, %67 : vector<8x8xf32>
    %c0_36 = arith.constant 0 : index
    %c2 = arith.constant 2 : index
    %c0_37 = arith.constant 0 : index
    %c0_38 = arith.constant 0 : index
    %69 = vector.load %arg7[%c0_36, %c2, %c0_37, %c0_38] : memref<1x4x8x8xf32, #tpu.memory_space<vmem>>, vector<1x1x8x8xf32>
    %70 = vector.shape_cast %69 : vector<1x1x8x8xf32> to vector<8x8xf32>
    %71 = vector.shape_cast %68 : vector<8x8xf32> to vector<1x1x8x8xf32>
    tpu.vector_store %arg7[%c0_36, %c2, %c0_37, %c0_38], %71 {strides = array<i32>} : memref<1x4x8x8xf32, #tpu.memory_space<vmem>>, vector<1x1x8x8xf32>,
    %72 = arith.truncf %68 : vector<8x8xf32> to vector<8x8xbf16>
    %cst_39 = arith.constant dense<0.000000e+00> : vector<8x8xf32>
    %73 = tpu.matmul %72, %56, %cst_39 {dimension_numbers = #tpu.dot_dimension_numbers<[1], [0], [0], [1], [0, 0, 1, 1], [], []>} : vector<8x8xbf16>, vector<8x8xbf16>, vector<8x8xf32> -> vector<8x8xf32>
    %74 = arith.truncf %73 : vector<8x8xf32> to vector<8x8xbf16>
    %c0_40 = arith.constant 0 : index
    %c2_41 = arith.constant 2 : index
    %c0_42 = arith.constant 0 : index
    %c0_43 = arith.constant 0 : index
    %75 = vector.load %arg6[%c0_40, %c2_41, %c0_42, %c0_43] : memref<1x4x8x8xbf16, #tpu.memory_space<vmem>>, vector<1x1x8x8xbf16>
    %76 = vector.shape_cast %75 : vector<1x1x8x8xbf16> to vector<8x8xbf16>
    %77 = vector.shape_cast %74 : vector<8x8xbf16> to vector<1x1x8x8xbf16>
    tpu.vector_store %arg6[%c0_40, %c2_41, %c0_42, %c0_43], %77 {strides = array<i32>} : memref<1x4x8x8xbf16, #tpu.memory_space<vmem>>, vector<1x1x8x8xbf16>,
    %78 = vector.extract_strided_slice %1 {offsets = [0, 24], sizes = [8, 8], strides = [1, 1]} : vector<8x32xbf16> to vector<8x8xbf16>
    %79 = vector.extract_strided_slice %3 {offsets = [0, 24], sizes = [8, 8], strides = [1, 1]} : vector<8x32xbf16> to vector<8x8xbf16>
    %80 = vector.extract_strided_slice %5 {offsets = [0, 24], sizes = [8, 8], strides = [1, 1]} : vector<8x32xbf16> to vector<8x8xbf16>
    %cst_44 = arith.constant dense<0.000000e+00> : vector<8x8xf32>
    %81 = tpu.matmul %78, %79, %cst_44 {dimension_numbers = #tpu.dot_dimension_numbers<[1], [1], [0], [0], [0, 0, 1, 0], [], []>} : vector<8x8xbf16>, vector<8x8xbf16>, vector<8x8xf32> -> vector<8x8xf32>
    %cst_45 = arith.constant 0.353553385 : f32
    %82 = vector.broadcast %cst_45 : f32 to vector<8x8xf32>
    %83 = arith.mulf %81, %82 : vector<8x8xf32>
    %cst_46 = arith.constant dense<0xFF800000> : vector<8xf32>
    %84 = vector.multi_reduction <maximumf>, %83, %cst_46 [1] : vector<8x8xf32> to vector<8xf32>
    %85 = vector.shape_cast %84 : vector<8xf32> to vector<8x1xf32>
    %86 = vector.broadcast %85 : vector<8x1xf32> to vector<8x8xf32>
    %87 = arith.subf %83, %86 : vector<8x8xf32>
    %88 = math.exp %87 : vector<8x8xf32>
    %cst_47 = arith.constant dense<0.000000e+00> : vector<8xf32>
    %89 = vector.multi_reduction <add>, %88, %cst_47 [1] : vector<8x8xf32> to vector<8xf32>
    %90 = vector.shape_cast %89 : vector<8xf32> to vector<8x1xf32>
    %91 = vector.broadcast %90 : vector<8x1xf32> to vector<8x8xf32>
    %92 = arith.divf %88, %91 : vector<8x8xf32>
    %c0_48 = arith.constant 0 : index
    %c3 = arith.constant 3 : index
    %c0_49 = arith.constant 0 : index
    %c0_50 = arith.constant 0 : index
    %93 = vector.load %arg7[%c0_48, %c3, %c0_49, %c0_50] : memref<1x4x8x8xf32, #tpu.memory_space<vmem>>, vector<1x1x8x8xf32>
    %94 = vector.shape_cast %93 : vector<1x1x8x8xf32> to vector<8x8xf32>
    %95 = vector.shape_cast %92 : vector<8x8xf32> to vector<1x1x8x8xf32>
    tpu.vector_store %arg7[%c0_48, %c3, %c0_49, %c0_50], %95 {strides = array<i32>} : memref<1x4x8x8xf32, #tpu.memory_space<vmem>>, vector<1x1x8x8xf32>,
    %96 = arith.truncf %92 : vector<8x8xf32> to vector<8x8xbf16>
    %cst_51 = arith.constant dense<0.000000e+00> : vector<8x8xf32>
    %97 = tpu.matmul %96, %80, %cst_51 {dimension_numbers = #tpu.dot_dimension_numbers<[1], [0], [0], [1], [0, 0, 1, 1], [], []>} : vector<8x8xbf16>, vector<8x8xbf16>, vector<8x8xf32> -> vector<8x8xf32>
    %98 = arith.truncf %97 : vector<8x8xf32> to vector<8x8xbf16>
    %c0_52 = arith.constant 0 : index
    %c3_53 = arith.constant 3 : index
    %c0_54 = arith.constant 0 : index
    %c0_55 = arith.constant 0 : index
    %99 = vector.load %arg6[%c0_52, %c3_53, %c0_54, %c0_55] : memref<1x4x8x8xbf16, #tpu.memory_space<vmem>>, vector<1x1x8x8xbf16>
    %100 = vector.shape_cast %99 : vector<1x1x8x8xbf16> to vector<8x8xbf16>
    %101 = vector.shape_cast %98 : vector<8x8xbf16> to vector<1x1x8x8xbf16>
    tpu.vector_store %arg6[%c0_52, %c3_53, %c0_54, %c0_55], %101 {strides = array<i32>} : memref<1x4x8x8xbf16, #tpu.memory_space<vmem>>, vector<1x1x8x8xbf16>,
    return
  }
  func.func @transform_0(%arg0: i32, %arg1: i32, %arg2: i32) -> (i32, i32, i32) {
    %c0_i32 = arith.constant 0 : i32
    return %arg0, %arg2, %arg1 : i32, i32, i32
  }
  func.func @transform_1(%arg0: i32, %arg1: i32, %arg2: i32) -> (i32, i32, i32) {
    %c0_i32 = arith.constant 0 : i32
    %c0_i32_0 = arith.constant 0 : i32
    return %arg0, %c0_i32, %arg1 : i32, i32, i32
  }
  func.func @transform_2(%arg0: i32, %arg1: i32, %arg2: i32) -> (i32, i32, i32) {
    %c0_i32 = arith.constant 0 : i32
    %c0_i32_0 = arith.constant 0 : i32
    return %arg0, %c0_i32, %arg1 : i32, i32, i32
  }
  func.func @transform_3(%arg0: i32, %arg1: i32, %arg2: i32) -> (i32, i32, i32, i32) {
    %c0_i32 = arith.constant 0 : i32
    %c0_i32_0 = arith.constant 0 : i32
    return %arg0, %arg1, %arg2, %c0_i32 : i32, i32, i32, i32
  }
  func.func @transform_4(%arg0: i32, %arg1: i32, %arg2: i32) -> (i32, i32, i32, i32) {
    %c0_i32 = arith.constant 0 : i32
    %c0_i32_0 = arith.constant 0 : i32
    return %arg0, %arg1, %arg2, %c0_i32 : i32, i32, i32, i32
  }
}

</mosaic_0001>

<llo_original>
// kernel: mha_forward.5
$region0: #{mha_forward.5}
  #allocation0 [shape = 'u32[]', space=smem, size = 0x4, offset = 0x4, fixed_abs, tag = 'smem constant byte address 0x4 - core index']
  #allocation1 [shape = 'u32[144,128]{1,0:T(1,128)}', space=vmem, size = 0x12000, scoped, tag = 'internal scratch']
  %s0 = inlined_call_operand.vmem [shape: bf16[16,32], index: 0, kind: input, shape index: {}]
  %s1 = inlined_call_operand.vmem [shape: bf16[32,32], index: 1, kind: input, shape index: {}]
  %s2 = inlined_call_operand.vmem [shape: f32[1,32], index: 2, kind: input, shape index: {}]
  %s3 = inlined_call_operand.hbm [shape: f32[16,32], index: 3, kind: output, shape index: {}]
  %s4 = sld [smem:[#allocation0]]
  $region22: #{mha_forward.5} parent=0
    _
  %s6 = ssub.s32 1, %s4
  %s7 = scalar_select 0, %s6, %s4
  $region1: #{mha_forward.5} parent=0
    #allocation2 [shape = 'u8[8192]{0}', space=vmem, size = 0x2000, scoped, tag = 'output window, operand 0, single buffered']
    #allocation3 [shape = 's32[1]{0}', space=sflag, size = 0x4, scoped, tag = 'scoped memory for mha_forward.5']
    %8 = vsyncpa [#allocation3], 0
    // Predicated region
    $region2: #{mha_forward.5} parent=1 // pred_check
      _
    $region3: #{mha_forward.5} parent=1 // pred_check_branch
      %10 = sbr.rel (0) target = $region5
    $region4: #{mha_forward.5} parent=1 // pred_region
      _
    $region5: #{mha_forward.5} parent=1 // pred_fallthru
      _
    // Predicated region
    $region6: #{mha_forward.5} parent=1 // pred_check
      _
    $region7: #{mha_forward.5} parent=1 // pred_check_branch
      %12 = sbr.rel (0) target = $region9
    $region8: #{mha_forward.5} parent=1 // pred_region
      _
    $region9: #{mha_forward.5} parent=1 // pred_fallthru
      _
    // Predicated region
    $region10: #{mha_forward.5} parent=1 // pred_check
      _
    $region11: #{mha_forward.5} parent=1 // pred_check_branch
      %14 = sbr.rel (0) target = $region13
    $region12: #{mha_forward.5} parent=1 // pred_region
      _
    $region13: #{mha_forward.5} parent=1 // pred_fallthru
      _
    %v16 = vld [vmem:[%s0] sm:$0xf]
    %v17 = vld [vmem:[%s0 + $0x4] sm:$0xf]
    %v18 = vld [vmem:[%s1] sm:$0xf]
    %v19 = vld [vmem:[%s1 + $0x4] sm:$0xf]
    %v20 = vld [vmem:[%s1 + $0x8] sm:$0xf]
    %v21 = vld [vmem:[%s1 + $0xc] sm:$0xf]
    %v22 = vld [vmem:[%s2] sm:$0x1]
    %v24 = vlaneseq
    %v25 = vshrl.u32 %v24, 7
    %v26 = vsub.s32 0, %v25
    %v27 = vrot.slane %v22, %v26
    %v31 = vunpack.c.l.b16 %v16
    %v32 = vunpack.c.l.b16 %v17
    %v33 = vpack.c.b16 %v32, %v31
    %v38 = vunpack.c.l.b16 %v18
    %v39 = vunpack.c.l.b16 %v19
    %v40 = vunpack.c.l.b16 %v20
    %v41 = vunpack.c.l.b16 %v21
    %v42 = vpack.c.b16 %v39, %v38
    %v43 = vpack.c.b16 %v41, %v40
    %vm46 = vcmask 261120
    %v48 = vsel %vm46, %v33, 0
    %50 = vmatprep.subr.bf16.mxu0 0
    %51 = vmatpush1.bf16.msra.mxu0 %v42
    %52 = vmatprep.subr.bf16.mxu0 0
    %53 = vmatpush1.bf16.msra.mxu0 %v43
    %54 = vmatprep.subr.bf16.mxu0 0
    %55 = vmatpush1.bf16.msra.mxu0 0
    %56 = vmatprep.subr.bf16.mxu0 0
    %57 = vmatpush1.bf16.msra.mxu0 0
    %58 = vmatprep.subr.bf16.mxu0 0
    %59 = vmatpush1.bf16.msra.mxu0 0
    %60 = vmatprep.subr.bf16.mxu0 0
    %61 = vmatpush1.bf16.msra.mxu0 0
    %62 = vmatprep.subr.bf16.mxu0 0
    %63 = vmatpush1.bf16.msra.mxu0 0
    %64 = vmatprep.subr.bf16.mxu0 0
    %65 = vmatpush1.bf16.msra.mxu0 0
    %66 = vmatprep.subr.bf16.mxu0 0
    %67 = vmatpush1.bf16.msra.mxu0 0
    %68 = vmatprep.subr.bf16.mxu0 0
    %69 = vmatpush1.bf16.msra.mxu0 0
    %70 = vmatprep.subr.bf16.mxu0 0
    %71 = vmatpush1.bf16.msra.mxu0 0
    %72 = vmatprep.subr.bf16.mxu0 0
    %73 = vmatpush1.bf16.msra.mxu0 0
    %74 = vmatprep.subr.bf16.mxu0 0
    %75 = vmatpush1.bf16.msra.mxu0 0
    %76 = vmatprep.subr.bf16.mxu0 0
    %77 = vmatpush1.bf16.msra.mxu0 0
    %78 = vmatprep.subr.bf16.mxu0 0
    %79 = vmatpush1.bf16.msra.mxu0 0
    %80 = vmatprep.subr.bf16.mxu0 0
    %81 = vmatpush1.bf16.msra.mxu0 0
    %82 = vmatprep.mubr.bf16.mxu0 0
    %83 = vmatmul.mubr.bf16.gmra.mrb[0].mxu0 %v48
    %v84 = vpop.f32.mrb[0].mxu0
    %v85 = vadd.f32 %v27, %v84
    %v86 = vpop.f32.mrb[0].mxu0
    %v87 = vpop.f32.mrb[0].mxu0
    %v88 = vadd.f32 %v27, %v87
    %v89 = vpop.f32.mrb[0].mxu0
    %90 = vdwg.mxu0
    %91 = vst.msk [vmem:[#allocation2] sm:$0xff] %vm46, %v85
    %92 = vst.msk [vmem:[#allocation2 + $0x8] sm:$0xff] %vm46, %v88
    // Predicated region
    $region14: #{mha_forward.5} parent=1 // pred_check
      _
    $region15: #{mha_forward.5} parent=1 // pred_check_branch
      %94 = sbr.rel (0) target = $region17
    $region16: #{mha_forward.5} parent=1 // pred_region
      %s96 = ssub.s32 256, 256
      %97 = vsyncadd [#allocation3], %s96
      %s98 = sshll.u32 [#allocation2], 4
      %s99 = int_to_ptr.vmem [resolvable:$true] %s98
      %104 = dma.vmem_to_hbm [thread:$0]  %s99, 256, %s3, [#allocation3], 128, 128, 8
    $region17: #{mha_forward.5} parent=1 // pred_fallthru
      _
    // Predicated region
    $region18: #{mha_forward.5} parent=1 // pred_check
      _
    $region19: #{mha_forward.5} parent=1 // pred_check_branch
      %106 = sbr.rel (0) target = $region21
    $region20: #{mha_forward.5} parent=1 // pred_region
      %107 = dma.done [#allocation3], 256
    $region21: #{mha_forward.5} parent=1 // pred_fallthru
      _
    %108 = vsyncpa [#allocation3], 1

// kernel: mha_forward.3
$region0: #{mha_forward.3}
  #allocation0 [shape = 'u32[]', space=smem, size = 0x4, offset = 0x4, fixed_abs, tag = 'smem constant byte address 0x4 - core index']
  #allocation1 [shape = 'u32[144,128]{1,0:T(1,128)}', space=vmem, size = 0x12000, scoped, tag = 'internal scratch']
  %s0 = inlined_call_operand.vmem [shape: bf16[16,32], index: 0, kind: input, shape index: {}]
  %s1 = inlined_call_operand.vmem [shape: bf16[16,32], index: 1, kind: input, shape index: {}]
  %s2 = inlined_call_operand.vmem [shape: bf16[16,32], index: 2, kind: input, shape index: {}]
  %s3 = inlined_call_operand.vmem [shape: bf16[32,32], index: 3, kind: input, shape index: {}]
  %s4 = inlined_call_operand.vmem [shape: bf16[32,32], index: 4, kind: input, shape index: {}]
  %s5 = inlined_call_operand.vmem [shape: bf16[32,32], index: 5, kind: input, shape index: {}]
  %s6 = inlined_call_operand.vmem [shape: f32[1,32], index: 6, kind: input, shape index: {}]
  %s7 = inlined_call_operand.vmem [shape: f32[1,32], index: 7, kind: input, shape index: {}]
  %s8 = inlined_call_operand.vmem [shape: f32[1,32], index: 8, kind: input, shape index: {}]
  %s9 = inlined_call_operand.vmem [shape: bf16[16,32], index: 9, kind: output, shape index: {0}]
  %s10 = inlined_call_operand.vmem [shape: bf16[16,32], index: 10, kind: output, shape index: {1}]
  %s11 = inlined_call_operand.vmem [shape: bf16[16,32], index: 11, kind: output, shape index: {2}]
  %12 = xla_tuple %s9, %s10, %s11
  %s13 = sld [smem:[#allocation0]]
  $region62: #{mha_forward.3} parent=0
    _
  %s15 = ssub.s32 1, %s13
  %s16 = scalar_select 0, %s15, %s13
  // Predicated region
  $region2: #{mha_forward.3} parent=0 // pred_check
    _
  $region3: #{mha_forward.3} parent=0 // pred_check_branch
    %18 = sbr.rel (0) target = $region5
  $region4: #{mha_forward.3} parent=0 // pred_region
    _
  $region5: #{mha_forward.3} parent=0 // pred_fallthru
    _
  // Predicated region
  $region6: #{mha_forward.3} parent=0 // pred_check
    _
  $region7: #{mha_forward.3} parent=0 // pred_check_branch
    %20 = sbr.rel (0) target = $region9
  $region8: #{mha_forward.3} parent=0 // pred_region
    _
  $region9: #{mha_forward.3} parent=0 // pred_fallthru
    _
  // Predicated region
  $region10: #{mha_forward.3} parent=0 // pred_check
    _
  $region11: #{mha_forward.3} parent=0 // pred_check_branch
    %22 = sbr.rel (0) target = $region13
  $region12: #{mha_forward.3} parent=0 // pred_region
    _
  $region13: #{mha_forward.3} parent=0 // pred_fallthru
    _
  // Predicated region
  $region14: #{mha_forward.3} parent=0 // pred_check
    _
  $region15: #{mha_forward.3} parent=0 // pred_check_branch
    %24 = sbr.rel (0) target = $region17
  $region16: #{mha_forward.3} parent=0 // pred_region
    _
  $region17: #{mha_forward.3} parent=0 // pred_fallthru
    _
  // Predicated region
  $region18: #{mha_forward.3} parent=0 // pred_check
    _
  $region19: #{mha_forward.3} parent=0 // pred_check_branch
    %26 = sbr.rel (0) target = $region21
  $region20: #{mha_forward.3} parent=0 // pred_region
    _
  $region21: #{mha_forward.3} parent=0 // pred_fallthru
    _
  // Predicated region
  $region22: #{mha_forward.3} parent=0 // pred_check
    _
  $region23: #{mha_forward.3} parent=0 // pred_check_branch
    %28 = sbr.rel (0) target = $region25
  $region24: #{mha_forward.3} parent=0 // pred_region
    _
  $region25: #{mha_forward.3} parent=0 // pred_fallthru
    _
  // Predicated region
  $region26: #{mha_forward.3} parent=0 // pred_check
    _
  $region27: #{mha_forward.3} parent=0 // pred_check_branch
    %30 = sbr.rel (0) target = $region29
  $region28: #{mha_forward.3} parent=0 // pred_region
    _
  $region29: #{mha_forward.3} parent=0 // pred_fallthru
    _
  // Predicated region
  $region30: #{mha_forward.3} parent=0 // pred_check
    _
  $region31: #{mha_forward.3} parent=0 // pred_check_branch
    %32 = sbr.rel (0) target = $region33
  $region32: #{mha_forward.3} parent=0 // pred_region
    _
  $region33: #{mha_forward.3} parent=0 // pred_fallthru
    _
  // Predicated region
  $region34: #{mha_forward.3} parent=0 // pred_check
    _
  $region35: #{mha_forward.3} parent=0 // pred_check_branch
    %34 = sbr.rel (0) target = $region37
  $region36: #{mha_forward.3} parent=0 // pred_region
    _
  $region37: #{mha_forward.3} parent=0 // pred_fallthru
    _
  %v36 = vld [vmem:[%s0] sm:$0xf]
  %v37 = vld [vmem:[%s0 + $0x4] sm:$0xf]
  %v38 = vld [vmem:[%s3] sm:$0xf]
  %v39 = vld [vmem:[%s3 + $0x4] sm:$0xf]
  %v40 = vld [vmem:[%s3 + $0x8] sm:$0xf]
  %v41 = vld [vmem:[%s3 + $0xc] sm:$0xf]
  %v42 = vld [vmem:[%s6] sm:$0x1]
  %v44 = vlaneseq
  %v45 = vshrl.u32 %v44, 7
  %v46 = vsub.s32 0, %v45
  %v47 = vrot.slane %v42, %v46
  %v51 = vunpack.c.l.b16 %v36
  %v52 = vunpack.c.l.b16 %v37
  %v53 = vpack.c.b16 %v52, %v51
  %v58 = vunpack.c.l.b16 %v38
  %v59 = vunpack.c.l.b16 %v39
  %v60 = vunpack.c.l.b16 %v40
  %v61 = vunpack.c.l.b16 %v41
  %v62 = vpack.c.b16 %v59, %v58
  %v63 = vpack.c.b16 %v61, %v60
  %vm66 = vcmask 261120
  %v68 = vsel %vm66, %v53, 0
  %70 = vmatprep.subr.bf16.mxu0 0
  %71 = vmatpush1.bf16.msra.mxu0 %v62
  %72 = vmatprep.subr.bf16.mxu0 0
  %73 = vmatpush1.bf16.msra.mxu0 %v63
  %74 = vmatprep.subr.bf16.mxu0 0
  %75 = vmatpush1.bf16.msra.mxu0 0
  %76 = vmatprep.subr.bf16.mxu0 0
  %77 = vmatpush1.bf16.msra.mxu0 0
  %78 = vmatprep.subr.bf16.mxu0 0
  %79 = vmatpush1.bf16.msra.mxu0 0
  %80 = vmatprep.subr.bf16.mxu0 0
  %81 = vmatpush1.bf16.msra.mxu0 0
  %82 = vmatprep.subr.bf16.mxu0 0
  %83 = vmatpush1.bf16.msra.mxu0 0
  %84 = vmatprep.subr.bf16.mxu0 0
  %85 = vmatpush1.bf16.msra.mxu0 0
  %86 = vmatprep.subr.bf16.mxu0 0
  %87 = vmatpush1.bf16.msra.mxu0 0
  %88 = vmatprep.subr.bf16.mxu0 0
  %89 = vmatpush1.bf16.msra.mxu0 0
  %90 = vmatprep.subr.bf16.mxu0 0
  %91 = vmatpush1.bf16.msra.mxu0 0
  %92 = vmatprep.subr.bf16.mxu0 0
  %93 = vmatpush1.bf16.msra.mxu0 0
  %94 = vmatprep.subr.bf16.mxu0 0
  %95 = vmatpush1.bf16.msra.mxu0 0
  %96 = vmatprep.subr.bf16.mxu0 0
  %97 = vmatpush1.bf16.msra.mxu0 0
  %98 = vmatprep.subr.bf16.mxu0 0
  %99 = vmatpush1.bf16.msra.mxu0 0
  %100 = vmatprep.subr.bf16.mxu0 0
  %101 = vmatpush1.bf16.msra.mxu0 0
  %102 = vmatprep.mubr.bf16.mxu0 0
  %103 = vmatmul.mubr.bf16.gmra.mrb[0].mxu0 %v68
  %v104 = vpop.f32.mrb[0].mxu0
  %v105 = vadd.f32 %v47, %v104
  %v106 = vpop.f32.mrb[0].mxu0
  %v107 = vpop.f32.mrb[0].mxu0
  %v108 = vadd.f32 %v47, %v107
  %v109 = vpop.f32.mrb[0].mxu0
  %110 = vdwg.mxu0
  %v111 = vpack.c.bf16 %v108, %v105
  %v113 = vunpack.c.l.b16 %v111
  %v114 = vunpack.c.h.b16 %v111
  %v115 = vpack.c.b16 %v113, %v113
  %v116 = vpack.c.b16 %v114, %v114
  %vm119 = vcmask 257024
  %120 = vst.msk [vmem:[%s9] sm:$0xf] %vm119, %v115
  %121 = vst.msk [vmem:[%s9 + $0x4] sm:$0xf] %vm119, %v116
  %v122 = vld [vmem:[%s1] sm:$0xf]
  %v123 = vld [vmem:[%s1 + $0x4] sm:$0xf]
  %v124 = vld [vmem:[%s4] sm:$0xf]
  %v125 = vld [vmem:[%s4 + $0x4] sm:$0xf]
  %v126 = vld [vmem:[%s4 + $0x8] sm:$0xf]
  %v127 = vld [vmem:[%s4 + $0xc] sm:$0xf]
  %v128 = vld [vmem:[%s7] sm:$0x1]
  %v130 = vlaneseq
  %v131 = vshrl.u32 %v130, 7
  %v132 = vsub.s32 0, %v131
  %v133 = vrot.slane %v128, %v132
  %v137 = vunpack.c.l.b16 %v122
  %v138 = vunpack.c.l.b16 %v123
  %v139 = vpack.c.b16 %v138, %v137
  %v144 = vunpack.c.l.b16 %v124
  %v145 = vunpack.c.l.b16 %v125
  %v146 = vunpack.c.l.b16 %v126
  %v147 = vunpack.c.l.b16 %v127
  %v148 = vpack.c.b16 %v145, %v144
  %v149 = vpack.c.b16 %v147, %v146
  %v153 = vsel %vm66, %v139, 0
  %155 = vmatprep.subr.bf16.mxu0 0
  %156 = vmatpush1.bf16.msra.mxu0 %v148
  %157 = vmatprep.subr.bf16.mxu0 0
  %158 = vmatpush1.bf16.msra.mxu0 %v149
  %159 = vmatprep.subr.bf16.mxu0 0
  %160 = vmatpush1.bf16.msra.mxu0 0
  %161 = vmatprep.subr.bf16.mxu0 0
  %162 = vmatpush1.bf16.msra.mxu0 0
  %163 = vmatprep.subr.bf16.mxu0 0
  %164 = vmatpush1.bf16.msra.mxu0 0
  %165 = vmatprep.subr.bf16.mxu0 0
  %166 = vmatpush1.bf16.msra.mxu0 0
  %167 = vmatprep.subr.bf16.mxu0 0
  %168 = vmatpush1.bf16.msra.mxu0 0
  %169 = vmatprep.subr.bf16.mxu0 0
  %170 = vmatpush1.bf16.msra.mxu0 0
  %171 = vmatprep.subr.bf16.mxu0 0
  %172 = vmatpush1.bf16.msra.mxu0 0
  %173 = vmatprep.subr.bf16.mxu0 0
  %174 = vmatpush1.bf16.msra.mxu0 0
  %175 = vmatprep.subr.bf16.mxu0 0
  %176 = vmatpush1.bf16.msra.mxu0 0
  %177 = vmatprep.subr.bf16.mxu0 0
  %178 = vmatpush1.bf16.msra.mxu0 0
  %179 = vmatprep.subr.bf16.mxu0 0
  %180 = vmatpush1.bf16.msra.mxu0 0
  %181 = vmatprep.subr.bf16.mxu0 0
  %182 = vmatpush1.bf16.msra.mxu0 0
  %183 = vmatprep.subr.bf16.mxu0 0
  %184 = vmatpush1.bf16.msra.mxu0 0
  %185 = vmatprep.subr.bf16.mxu0 0
  %186 = vmatpush1.bf16.msra.mxu0 0
  %187 = vmatprep.mubr.bf16.mxu0 0
  %188 = vmatmul.mubr.bf16.gmra.mrb[0].mxu0 %v153
  %v189 = vpop.f32.mrb[0].mxu0
  %v190 = vadd.f32 %v133, %v189
  %v191 = vpop.f32.mrb[0].mxu0
  %v192 = vpop.f32.mrb[0].mxu0
  %v193 = vadd.f32 %v133, %v192
  %v194 = vpop.f32.mrb[0].mxu0
  %195 = vdwg.mxu0
  %v196 = vpack.c.bf16 %v193, %v190
  %v198 = vunpack.c.l.b16 %v196
  %v199 = vunpack.c.h.b16 %v196
  %v200 = vpack.c.b16 %v198, %v198
  %v201 = vpack.c.b16 %v199, %v199
  %204 = vst.msk [vmem:[%s10] sm:$0xf] %vm119, %v200
  %205 = vst.msk [vmem:[%s10 + $0x4] sm:$0xf] %vm119, %v201
  %v206 = vld [vmem:[%s2] sm:$0xf]
  %v207 = vld [vmem:[%s2 + $0x4] sm:$0xf]
  %v208 = vld [vmem:[%s5] sm:$0xf]
  %v209 = vld [vmem:[%s5 + $0x4] sm:$0xf]
  %v210 = vld [vmem:[%s5 + $0x8] sm:$0xf]
  %v211 = vld [vmem:[%s5 + $0xc] sm:$0xf]
  %v212 = vld [vmem:[%s8] sm:$0x1]
  %v214 = vlaneseq
  %v215 = vshrl.u32 %v214, 7
  %v216 = vsub.s32 0, %v215
  %v217 = vrot.slane %v212, %v216
  %v221 = vunpack.c.l.b16 %v206
  %v222 = vunpack.c.l.b16 %v207
  %v223 = vpack.c.b16 %v222, %v221
  %v228 = vunpack.c.l.b16 %v208
  %v229 = vunpack.c.l.b16 %v209
  %v230 = vunpack.c.l.b16 %v210
  %v231 = vunpack.c.l.b16 %v211
  %v232 = vpack.c.b16 %v229, %v228
  %v233 = vpack.c.b16 %v231, %v230
  %v237 = vsel %vm66, %v223, 0
  %239 = vmatprep.subr.bf16.mxu0 0
  %240 = vmatpush1.bf16.msra.mxu0 %v232
  %241 = vmatprep.subr.bf16.mxu0 0
  %242 = vmatpush1.bf16.msra.mxu0 %v233
  %243 = vmatprep.subr.bf16.mxu0 0
  %244 = vmatpush1.bf16.msra.mxu0 0
  %245 = vmatprep.subr.bf16.mxu0 0
  %246 = vmatpush1.bf16.msra.mxu0 0
  %247 = vmatprep.subr.bf16.mxu0 0
  %248 = vmatpush1.bf16.msra.mxu0 0
  %249 = vmatprep.subr.bf16.mxu0 0
  %250 = vmatpush1.bf16.msra.mxu0 0
  %251 = vmatprep.subr.bf16.mxu0 0
  %252 = vmatpush1.bf16.msra.mxu0 0
  %253 = vmatprep.subr.bf16.mxu0 0
  %254 = vmatpush1.bf16.msra.mxu0 0
  %255 = vmatprep.subr.bf16.mxu0 0
  %256 = vmatpush1.bf16.msra.mxu0 0
  %257 = vmatprep.subr.bf16.mxu0 0
  %258 = vmatpush1.bf16.msra.mxu0 0
  %259 = vmatprep.subr.bf16.mxu0 0
  %260 = vmatpush1.bf16.msra.mxu0 0
  %261 = vmatprep.subr.bf16.mxu0 0
  %262 = vmatpush1.bf16.msra.mxu0 0
  %263 = vmatprep.subr.bf16.mxu0 0
  %264 = vmatpush1.bf16.msra.mxu0 0
  %265 = vmatprep.subr.bf16.mxu0 0
  %266 = vmatpush1.bf16.msra.mxu0 0
  %267 = vmatprep.subr.bf16.mxu0 0
  %268 = vmatpush1.bf16.msra.mxu0 0
  %269 = vmatprep.subr.bf16.mxu0 0
  %270 = vmatpush1.bf16.msra.mxu0 0
  %271 = vmatprep.mubr.bf16.mxu0 0
  %272 = vmatmul.mubr.bf16.gmra.mrb[0].mxu0 %v237
  %v273 = vpop.f32.mrb[0].mxu0
  %v274 = vadd.f32 %v217, %v273
  %v275 = vpop.f32.mrb[0].mxu0
  %v276 = vpop.f32.mrb[0].mxu0
  %v277 = vadd.f32 %v217, %v276
  %v278 = vpop.f32.mrb[0].mxu0
  %279 = vdwg.mxu0
  %v280 = vpack.c.bf16 %v277, %v274
  %v282 = vunpack.c.l.b16 %v280
  %v283 = vunpack.c.h.b16 %v280
  %v284 = vpack.c.b16 %v282, %v282
  %v285 = vpack.c.b16 %v283, %v283
  %288 = vst.msk [vmem:[%s11] sm:$0xf] %vm119, %v284
  %289 = vst.msk [vmem:[%s11 + $0x4] sm:$0xf] %vm119, %v285
  // Predicated region
  $region38: #{mha_forward.3} parent=0 // pred_check
    _
  $region39: #{mha_forward.3} parent=0 // pred_check_branch
    %291 = sbr.rel (0) target = $region41
  $region40: #{mha_forward.3} parent=0 // pred_region
    _
  $region41: #{mha_forward.3} parent=0 // pred_fallthru
    _
  // Predicated region
  $region42: #{mha_forward.3} parent=0 // pred_check
    _
  $region43: #{mha_forward.3} parent=0 // pred_check_branch
    %293 = sbr.rel (0) target = $region45
  $region44: #{mha_forward.3} parent=0 // pred_region
    _
  $region45: #{mha_forward.3} parent=0 // pred_fallthru
    _
  // Predicated region
  $region46: #{mha_forward.3} parent=0 // pred_check
    _
  $region47: #{mha_forward.3} parent=0 // pred_check_branch
    %295 = sbr.rel (0) target = $region49
  $region48: #{mha_forward.3} parent=0 // pred_region
    _
  $region49: #{mha_forward.3} parent=0 // pred_fallthru
    _
  // Predicated region
  $region50: #{mha_forward.3} parent=0 // pred_check
    _
  $region51: #{mha_forward.3} parent=0 // pred_check_branch
    %297 = sbr.rel (0) target = $region53
  $region52: #{mha_forward.3} parent=0 // pred_region
    _
  $region53: #{mha_forward.3} parent=0 // pred_fallthru
    _
  // Predicated region
  $region54: #{mha_forward.3} parent=0 // pred_check
    _
  $region55: #{mha_forward.3} parent=0 // pred_check_branch
    %299 = sbr.rel (0) target = $region57
  $region56: #{mha_forward.3} parent=0 // pred_region
    _
  $region57: #{mha_forward.3} parent=0 // pred_fallthru
    _
  // Predicated region
  $region58: #{mha_forward.3} parent=0 // pred_check
    _
  $region59: #{mha_forward.3} parent=0 // pred_check_branch
    %301 = sbr.rel (0) target = $region61
  $region60: #{mha_forward.3} parent=0 // pred_region
    _
  $region61: #{mha_forward.3} parent=0 // pred_fallthru
    _

// kernel: mha_forward.4
$region0: #{mha_forward.4}
  #allocation0 [shape = 'u32[]', space=smem, size = 0x4, offset = 0x4, fixed_abs, tag = 'smem constant byte address 0x4 - core index']
  #allocation1 [shape = 'u32[144,128]{1,0:T(1,128)}', space=vmem, size = 0x12000, scoped, tag = 'internal scratch']
  %s0 = inlined_call_operand.vmem [shape: bf16[2,8,32], index: 0, kind: input, shape index: {}]
  %s1 = inlined_call_operand.vmem [shape: bf16[2,8,32], index: 1, kind: input, shape index: {}]
  %s2 = inlined_call_operand.vmem [shape: bf16[2,8,32], index: 2, kind: input, shape index: {}]
  %s3 = inlined_call_operand.vmem [shape: bf16[2,4,8,8], index: 3, kind: output, shape index: {0}]
  %s4 = inlined_call_operand.hbm [shape: f32[2,4,8,8], index: 4, kind: output, shape index: {1}]
  %5 = xla_tuple %s3, %s4
  %s6 = sld [smem:[#allocation0]]
  $region53: #{mha_forward.4} parent=0
    _
  %s8 = ssub.s32 1, %s6
  %s9 = scalar_select 0, %s8, %s6
  $region1: #{mha_forward.4} parent=0
    #allocation2 [shape = 'u8[32768]{0}', space=vmem, size = 0x8000, scoped, tag = 'output window, operand 1']
    #allocation3 [shape = 's32[2]{0}', space=sflag, size = 0x8, scoped, tag = 'scoped memory for mha_forward.4']
    %10 = vsyncpa [#allocation3], 0
    %s11 = scalar_lea.sflag [#allocation3], 1
    %12 = vsyncpa %s11, 0
    loop: start=0, step=1, limit=4
    $region2: #{mha_forward.4} parent=1 // loop_pre_header
      _
    $region3: #{mha_forward.4} parent=1 // loop_header
      %s14 = sphi 0, %s18
      %p15 = scmp.ge.s32.totalorder %s14, 4
      %s21 = sphi 0, %s40
      %s22 = sphi 0, %s36
      %s23 = sphi 0, %s32
      %s24 = sphi 0, %s21
      %s25 = sphi 0, %s22
      %s26 = sphi 0, %s23
      %s27 = sphi 0, %s24
      %s28 = sphi 0, %s25
      %s29 = sphi 0, %s26
      %s47 = sphi 0, %s49
      %s50 = sphi 0, %s47
      %s51 = sphi 0, %s50
      %s67 = sphi 0, %s51
      %s75 = sphi 0, %s77
      %s78 = sphi 0, %s75
      %s79 = sphi 0, %s78
      %s95 = sphi 0, %s79
      %s103 = sphi 0, %s105
      %s106 = sphi 0, %s103
      %s107 = sphi 0, %s106
      %s123 = sphi 0, %s107
      %s133 = sphi 0, %s135
      %s136 = sphi 0, %s133
      %s137 = sphi 0, %s136
      %s153 = sphi 0, %s137
      %s163 = sphi 0, %s165
      %s166 = sphi 0, %s163
      %s167 = sphi 0, %s166
      %s183 = sphi 0, %s167
    $region4: #{mha_forward.4} parent=1 // loop_header_branch
      %17 = sbr.rel (%p15) target = $region8
    $region5: #{mha_forward.4} parent=1 // loop_body
      %s19 = ssub.s32 %s14, 1
      %s20 = ssub.s32 %s14, 2
      %s30 = sadd.s32 1, %s23
      %p31 = scmp.ge.s32.totalorder %s30, 1
      %s32 = scalar_select %p31, 0, %s30
      %s33 = sadd.s32 1, %s22
      %s34 = scalar_select %p31, %s33, %s22
      %p35 = scmp.ge.s32.totalorder %s34, 1
      %s36 = scalar_select %p35, 0, %s34
      %s37 = sadd.s32 1, %s21
      %s38 = scalar_select %p35, %s37, %s21
      %p39 = scmp.ge.s32.totalorder %s38, 2
      %s40 = scalar_select %p39, 0, %s38
      %s41 = ssub.s32 %s21, %s40
      %s42 = ssub.s32 %s23, %s32
      %s43 = sor.u32 %s41, %s42
      %s44 = ssub.s32 %s22, %s36
      %s45 = sor.u32 %s43, %s44
      %p46 = scmp.eq.s32.totalorder %s45, 0
      %s48 = sadd.s32 %s47, 1
      %s49 = scalar_select %p46, %s47, %s48
      %p52 = pneg %p46
      %p53 = scmp.eq.s32.totalorder %s14, 1
      %p54 = por %p52, %p53
      %p55 = scmp.ne.s32.totalorder %s47, %s50
      %p56 = scmp.eq.s32.totalorder %s14, 0
      %p57 = por %p55, %p56
      %p58 = scmp.ne.s32.totalorder %s47, %s50
      %p59 = scmp.eq.s32.totalorder %s19, 1
      %p60 = por %p58, %p59
      %p61 = scmp.ne.s32.totalorder %s50, %s51
      %p62 = scmp.eq.s32.totalorder %s19, 0
      %p63 = por %p61, %p62
      %p64 = scmp.ne.s32.totalorder %s50, %s51
      %p65 = scmp.eq.s32.totalorder %s20, 1
      %p66 = por %p64, %p65
      %p68 = scmp.ne.s32.totalorder %s51, %s67
      %p69 = scmp.eq.s32.totalorder %s20, 0
      %p70 = por %p68, %p69
      %s71 = ssub.s32 %s21, %s40
      %s72 = ssub.s32 %s22, %s36
      %s73 = sor.u32 %s71, %s72
      %p74 = scmp.eq.s32.totalorder %s73, 0
      %s76 = sadd.s32 %s75, 1
      %s77 = scalar_select %p74, %s75, %s76
      %p80 = pneg %p74
      %p81 = scmp.eq.s32.totalorder %s14, 1
      %p82 = por %p80, %p81
      %p83 = scmp.ne.s32.totalorder %s75, %s78
      %p84 = scmp.eq.s32.totalorder %s14, 0
      %p85 = por %p83, %p84
      %p86 = scmp.ne.s32.totalorder %s75, %s78
      %p87 = scmp.eq.s32.totalorder %s19, 1
      %p88 = por %p86, %p87
      %p89 = scmp.ne.s32.totalorder %s78, %s79
      %p90 = scmp.eq.s32.totalorder %s19, 0
      %p91 = por %p89, %p90
      %p92 = scmp.ne.s32.totalorder %s78, %s79
      %p93 = scmp.eq.s32.totalorder %s20, 1
      %p94 = por %p92, %p93
      %p96 = scmp.ne.s32.totalorder %s79, %s95
      %p97 = scmp.eq.s32.totalorder %s20, 0
      %p98 = por %p96, %p97
      %s99 = ssub.s32 %s21, %s40
      %s100 = ssub.s32 %s22, %s36
      %s101 = sor.u32 %s99, %s100
      %p102 = scmp.eq.s32.totalorder %s101, 0
      %s104 = sadd.s32 %s103, 1
      %s105 = scalar_select %p102, %s103, %s104
      %p108 = pneg %p102
      %p109 = scmp.eq.s32.totalorder %s14, 1
      %p110 = por %p108, %p109
      %p111 = scmp.ne.s32.totalorder %s103, %s106
      %p112 = scmp.eq.s32.totalorder %s14, 0
      %p113 = por %p111, %p112
      %p114 = scmp.ne.s32.totalorder %s103, %s106
      %p115 = scmp.eq.s32.totalorder %s19, 1
      %p116 = por %p114, %p115
      %p117 = scmp.ne.s32.totalorder %s106, %s107
      %p118 = scmp.eq.s32.totalorder %s19, 0
      %p119 = por %p117, %p118
      %p120 = scmp.ne.s32.totalorder %s106, %s107
      %p121 = scmp.eq.s32.totalorder %s20, 1
      %p122 = por %p120, %p121
      %p124 = scmp.ne.s32.totalorder %s107, %s123
      %p125 = scmp.eq.s32.totalorder %s20, 0
      %p126 = por %p124, %p125
      %s127 = ssub.s32 %s21, %s40
      %s128 = ssub.s32 %s22, %s36
      %s129 = sor.u32 %s127, %s128
      %s130 = ssub.s32 %s23, %s32
      %s131 = sor.u32 %s129, %s130
      %p132 = scmp.eq.s32.totalorder %s131, 0
      %s134 = sadd.s32 %s133, 1
      %s135 = scalar_select %p132, %s133, %s134
      %p138 = pneg %p132
      %p139 = scmp.eq.s32.totalorder %s14, 1
      %p140 = por %p138, %p139
      %p141 = scmp.ne.s32.totalorder %s133, %s136
      %p142 = scmp.eq.s32.totalorder %s14, 0
      %p143 = por %p141, %p142
      %p144 = scmp.ne.s32.totalorder %s133, %s136
      %p145 = scmp.eq.s32.totalorder %s19, 1
      %p146 = por %p144, %p145
      %p147 = scmp.ne.s32.totalorder %s136, %s137
      %p148 = scmp.eq.s32.totalorder %s19, 0
      %p149 = por %p147, %p148
      %p150 = scmp.ne.s32.totalorder %s136, %s137
      %p151 = scmp.eq.s32.totalorder %s20, 1
      %p152 = por %p150, %p151
      %p154 = scmp.ne.s32.totalorder %s137, %s153
      %p155 = scmp.eq.s32.totalorder %s20, 0
      %p156 = por %p154, %p155
      %s157 = ssub.s32 %s21, %s40
      %s158 = ssub.s32 %s22, %s36
      %s159 = sor.u32 %s157, %s158
      %s160 = ssub.s32 %s23, %s32
      %s161 = sor.u32 %s159, %s160
      %p162 = scmp.eq.s32.totalorder %s161, 0
      %s164 = sadd.s32 %s163, 1
      %s165 = scalar_select %p162, %s163, %s164
      %p168 = pneg %p162
      %p169 = scmp.eq.s32.totalorder %s14, 1
      %p170 = por %p168, %p169
      %p171 = scmp.ne.s32.totalorder %s163, %s166
      %p172 = scmp.eq.s32.totalorder %s14, 0
      %p173 = por %p171, %p172
      %p174 = scmp.ne.s32.totalorder %s163, %s166
      %p175 = scmp.eq.s32.totalorder %s19, 1
      %p176 = por %p174, %p175
      %p177 = scmp.ne.s32.totalorder %s166, %s167
      %p178 = scmp.eq.s32.totalorder %s19, 0
      %p179 = por %p177, %p178
      %p180 = scmp.ne.s32.totalorder %s166, %s167
      %p181 = scmp.eq.s32.totalorder %s20, 1
      %p182 = por %p180, %p181
      %p184 = scmp.ne.s32.totalorder %s167, %s183
      %p185 = scmp.eq.s32.totalorder %s20, 0
      %p186 = por %p184, %p185
      %p187 = scmp.le.s32.totalorder 1, %s14
      %p188 = scmp.lt.s32.totalorder %s14, 3
      %p189 = pnand %p187, %p188
      %p190 = pneg %p189
      // Predicated region
      $region9: #{mha_forward.4} parent=5 // pred_check
        _
      $region10: #{mha_forward.4} parent=5 // pred_check_branch
        %192 = sbr.rel (%p189) target = $region12
      $region11: #{mha_forward.4} parent=5 // pred_region
        %s193 = ssub.s32 %s14, 1
      $region12: #{mha_forward.4} parent=5 // pred_fallthru
        _
      %p194 = scmp.lt.s32.totalorder %s14, 2
      // Predicated region
      $region13: #{mha_forward.4} parent=5 // pred_check
        %p195 = pneg %p194
      $region14: #{mha_forward.4} parent=5 // pred_check_branch
        %197 = sbr.rel (%p195) target = $region16
      $region15: #{mha_forward.4} parent=5 // pred_region
        // Predicated region
        $region17: #{mha_forward.4} parent=15 // pred_check
          %p198 = pneg %p57
        $region18: #{mha_forward.4} parent=15 // pred_check_branch
          %200 = sbr.rel (%p198) target = $region20
        $region19: #{mha_forward.4} parent=15 // pred_region
          %p201 = scmp.lt.s32.totalorder %s21, 1
          %s202 = scalar_select %p201, %s21, 1
          %p203 = scmp.lt.s32.totalorder %s23, 0
          %s204 = scalar_select %p203, %s23, 0
          %p205 = scmp.lt.s32.totalorder %s22, 0
          %s206 = scalar_select %p205, %s22, 0
          %s207 = sadd.s32 %s206, %s204
          %s208 = sadd.s32 %s207, %s202
          %s209 = smul.addr %s208, 4
          %s210 = scalar_lea.vmem %s0, %s209
        $region20: #{mha_forward.4} parent=15 // pred_fallthru
          _
        // Predicated region
        $region21: #{mha_forward.4} parent=15 // pred_check
          %p211 = pneg %p85
        $region22: #{mha_forward.4} parent=15 // pred_check_branch
          %213 = sbr.rel (%p211) target = $region24
        $region23: #{mha_forward.4} parent=15 // pred_region
          %p214 = scmp.lt.s32.totalorder %s21, 1
          %s215 = scalar_select %p214, %s21, 1
          %p216 = scmp.lt.s32.totalorder %s22, 0
          %s217 = scalar_select %p216, %s22, 0
          %s218 = sadd.s32 %s217, %s215
          %s219 = smul.addr %s218, 4
          %s220 = scalar_lea.vmem %s1, %s219
        $region24: #{mha_forward.4} parent=15 // pred_fallthru
          _
        // Predicated region
        $region25: #{mha_forward.4} parent=15 // pred_check
          %p221 = pneg %p113
        $region26: #{mha_forward.4} parent=15 // pred_check_branch
          %223 = sbr.rel (%p221) target = $region28
        $region27: #{mha_forward.4} parent=15 // pred_region
          %p224 = scmp.lt.s32.totalorder %s21, 1
          %s225 = scalar_select %p224, %s21, 1
          %p226 = scmp.lt.s32.totalorder %s22, 0
          %s227 = scalar_select %p226, %s22, 0
          %s228 = sadd.s32 %s227, %s225
          %s229 = smul.addr %s228, 4
          %s230 = scalar_lea.vmem %s2, %s229
        $region28: #{mha_forward.4} parent=15 // pred_fallthru
          _
      $region16: #{mha_forward.4} parent=5 // pred_fallthru
        _
      %p231 = scmp.le.s32.totalorder 1, %s14
      %p232 = scmp.lt.s32.totalorder %s14, 3
      %p233 = pnand %p231, %p232
      %p234 = pneg %p233
      // Predicated region
      $region29: #{mha_forward.4} parent=5 // pred_check
        _
      $region30: #{mha_forward.4} parent=5 // pred_check_branch
        %236 = sbr.rel (%p233) target = $region32
      $region31: #{mha_forward.4} parent=5 // pred_region
        %s237 = ssub.s32 %s14, 1
        %p238 = scmp.lt.s32.totalorder %s24, 1
        %s239 = scalar_select %p238, %s24, 1
        %p240 = scmp.lt.s32.totalorder %s26, 0
        %s241 = scalar_select %p240, %s26, 0
        %p242 = scmp.lt.s32.totalorder %s25, 0
        %s243 = scalar_select %p242, %s25, 0
        %s244 = sadd.s32 %s243, %s241
        %s245 = sadd.s32 %s244, %s239
        %s246 = smul.addr %s245, 4
        %s247 = scalar_lea.vmem %s0, %s246
        %p248 = pneg %p63
        %p249 = pneg %p60
        %p250 = scmp.lt.s32.totalorder %s24, 1
        %s251 = scalar_select %p250, %s24, 1
        %p252 = scmp.lt.s32.totalorder %s25, 0
        %s253 = scalar_select %p252, %s25, 0
        %s254 = sadd.s32 %s253, %s251
        %s255 = smul.addr %s254, 4
        %s256 = scalar_lea.vmem %s1, %s255
        %p257 = pneg %p91
        %p258 = pneg %p88
        %p259 = scmp.lt.s32.totalorder %s24, 1
        %s260 = scalar_select %p259, %s24, 1
        %p261 = scmp.lt.s32.totalorder %s25, 0
        %s262 = scalar_select %p261, %s25, 0
        %s263 = sadd.s32 %s262, %s260
        %s264 = smul.addr %s263, 4
        %s265 = scalar_lea.vmem %s2, %s264
        %p266 = pneg %p119
        %p267 = pneg %p116
        %p268 = pneg %p149
        %p269 = pneg %p146
        %s270 = smul.u32 4, %s25
        %p271 = scmp.lt.s32.totalorder %s24, 1
        %s272 = scalar_select %p271, %s24, 1
        %p273 = scmp.lt.s32.totalorder %s270, 3
        %s274 = scalar_select %p273, %s270, 3
        %p275 = scmp.lt.s32.totalorder %s26, 0
        %s276 = scalar_select %p275, %s26, 0
        %s277 = sadd.s32 %s276, %s274
        %s278 = smul.addr %s272, 4
        %s279 = sadd.s32 %s277, %s278
        %s280 = smul.addr %s279, 4
        %s281 = scalar_lea.vmem %s3, %s280
        %p282 = pneg %p179
        %p283 = pneg %p176
        %s284 = sand.u32 %s166, 1
        %s285 = scalar_lea.sflag [#allocation3], %s284
        %s286 = sand.u32 %s166, 1
        %s287 = smul.addr %s286, 32
        %s288 = scalar_lea.vmem [#allocation2], %s287
        %p289 = scmp.lt.s32.totalorder %s24, 1
        %s290 = scalar_select %p289, %s24, 1
        %p291 = scmp.lt.s32.totalorder %s26, 0
        %s292 = scalar_select %p291, %s26, 0
        %p293 = scmp.lt.s32.totalorder %s25, 0
        %s294 = scalar_select %p293, %s25, 0
        %s295 = sadd.s32 %s294, %s292
        %s296 = sadd.s32 %s295, %s290
        %s297 = smul.addr %s296, 4
        %s298 = scalar_lea.vmem %s0, %s297
        %p299 = scmp.lt.s32.totalorder %s24, 1
        %s300 = scalar_select %p299, %s24, 1
        %p301 = scmp.lt.s32.totalorder %s25, 0
        %s302 = scalar_select %p301, %s25, 0
        %s303 = sadd.s32 %s302, %s300
        %s304 = smul.addr %s303, 4
        %s305 = scalar_lea.vmem %s1, %s304
        %p306 = scmp.lt.s32.totalorder %s24, 1
        %s307 = scalar_select %p306, %s24, 1
        %p308 = scmp.lt.s32.totalorder %s25, 0
        %s309 = scalar_select %p308, %s25, 0
        %s310 = sadd.s32 %s309, %s307
        %s311 = smul.addr %s310, 4
        %s312 = scalar_lea.vmem %s2, %s311
        %s313 = smul.u32 4, %s25
        %p314 = scmp.lt.s32.totalorder %s24, 1
        %s315 = scalar_select %p314, %s24, 1
        %p316 = scmp.lt.s32.totalorder %s313, 3
        %s317 = scalar_select %p316, %s313, 3
        %p318 = scmp.lt.s32.totalorder %s26, 0
        %s319 = scalar_select %p318, %s26, 0
        %s320 = sadd.s32 %s319, %s317
        %s321 = smul.addr %s315, 4
        %s322 = sadd.s32 %s320, %s321
        %s323 = smul.addr %s322, 4
        %s324 = scalar_lea.vmem %s3, %s323
        %s325 = smul.u32 4, %s25
        %s326 = smul.u32 4, %s25
        %v328 = vld [vmem:[%s298] sm:$0xf]
        %v329 = vld [vmem:[%s305] sm:$0xf]
        %v330 = vld [vmem:[%s312] sm:$0xf]
        %vm331 = vcmask 64512
        %v333 = vsel %vm331, %v328, 0
        %v336 = vsel %vm331, %v329, 0
        %338 = vmatprep.subr.bf16.mxu0 0
        %339 = vmatpush1.bf16.xpose.msra.mxu0 %v336
        %340 = vmatprep.subr.bf16.mxu0 0
        %341 = vmatpush1.bf16.xpose.msra.mxu0 0
        %342 = vmatprep.subr.bf16.mxu0 0
        %343 = vmatpush1.bf16.xpose.msra.mxu0 0
        %344 = vmatprep.subr.bf16.mxu0 0
        %345 = vmatpush1.bf16.xpose.msra.mxu0 0
        %346 = vmatprep.subr.bf16.mxu0 0
        %347 = vmatpush1.bf16.xpose.msra.mxu0 0
        %348 = vmatprep.subr.bf16.mxu0 0
        %349 = vmatpush1.bf16.xpose.msra.mxu0 0
        %350 = vmatprep.subr.bf16.mxu0 0
        %351 = vmatpush1.bf16.xpose.msra.mxu0 0
        %352 = vmatprep.subr.bf16.mxu0 0
        %353 = vmatpush1.bf16.xpose.msra.mxu0 0
        %354 = vmatprep.subr.bf16.mxu0 0
        %355 = vmatpush1.bf16.xpose.msra.mxu0 0
        %356 = vmatprep.subr.bf16.mxu0 0
        %357 = vmatpush1.bf16.xpose.msra.mxu0 0
        %358 = vmatprep.subr.bf16.mxu0 0
        %359 = vmatpush1.bf16.xpose.msra.mxu0 0
        %360 = vmatprep.subr.bf16.mxu0 0
        %361 = vmatpush1.bf16.xpose.msra.mxu0 0
        %362 = vmatprep.subr.bf16.mxu0 0
        %363 = vmatpush1.bf16.xpose.msra.mxu0 0
        %364 = vmatprep.subr.bf16.mxu0 0
        %365 = vmatpush1.bf16.xpose.msra.mxu0 0
        %366 = vmatprep.subr.bf16.mxu0 0
        %367 = vmatpush1.bf16.xpose.msra.mxu0 0
        %368 = vmatprep.subr.bf16.mxu0 0
        %369 = vmatpush1.bf16.xpose.msra.mxu0 0
        %370 = vmatprep.mubr.bf16.mxu0 0
        %371 = vmatmul.mubr.bf16.gmra.mrb[0].mxu0 %v333
        %v372 = vpop.f32.mrb[0].mxu0
        %v373 = vadd.f32 0.0, %v372
        %v374 = vpop.f32.mrb[0].mxu0
        %v375 = vpop.f32.mrb[0].mxu0
        %v376 = vpop.f32.mrb[0].mxu0
        %377 = vdwg.mxu0
        %v378 = vmul.f32 %v373, 0.35355338
        %v379 = vsel %vm331, %v378, -inf
        %380 = vmax.xlane.f32.xlu0 %v379
        %v381 = vpop.xlane.xlu0 %380
        %v382 = vsub.f32 %v378, %v381
        %v383 = vmul.f32 %v382, 1.442695
        %v384 = vpow.pop %v383
        %v385 = vsel %vm331, %v384, 0.0
        %386 = vadd.xlane.f32.xlu0 %v385
        %v387 = vpop.xlane.xlu0 %386
        %v388 = vrcp.pop %v387
        %v389 = vmul.f32 %v384, %v388
        %390 = vst.msk [vmem:[%s288] sm:$0xff] %vm331, %v389
        %v391 = vpack.c.bf16 %v389, %v389
        %v393 = vsel %vm331, %v391, 0
        %vm395 = vcmask 1043456
        %v397 = vsel %vm395, %v330, 0
        %399 = vmatprep.subr.bf16.mxu0 0
        %400 = vmatpush1.bf16.msra.mxu0 %v397
        %401 = vmatprep.subr.bf16.mxu0 0
        %402 = vmatpush1.bf16.msra.mxu0 0
        %403 = vmatprep.subr.bf16.mxu0 0
        %404 = vmatpush1.bf16.msra.mxu0 0
        %405 = vmatprep.subr.bf16.mxu0 0
        %406 = vmatpush1.bf16.msra.mxu0 0
        %407 = vmatprep.subr.bf16.mxu0 0
        %408 = vmatpush1.bf16.msra.mxu0 0
        %409 = vmatprep.subr.bf16.mxu0 0
        %410 = vmatpush1.bf16.msra.mxu0 0
        %411 = vmatprep.subr.bf16.mxu0 0
        %412 = vmatpush1.bf16.msra.mxu0 0
        %413 = vmatprep.subr.bf16.mxu0 0
        %414 = vmatpush1.bf16.msra.mxu0 0
        %415 = vmatprep.subr.bf16.mxu0 0
        %416 = vmatpush1.bf16.msra.mxu0 0
        %417 = vmatprep.subr.bf16.mxu0 0
        %418 = vmatpush1.bf16.msra.mxu0 0
        %419 = vmatprep.subr.bf16.mxu0 0
        %420 = vmatpush1.bf16.msra.mxu0 0
        %421 = vmatprep.subr.bf16.mxu0 0
        %422 = vmatpush1.bf16.msra.mxu0 0
        %423 = vmatprep.subr.bf16.mxu0 0
        %424 = vmatpush1.bf16.msra.mxu0 0
        %425 = vmatprep.subr.bf16.mxu0 0
        %426 = vmatpush1.bf16.msra.mxu0 0
        %427 = vmatprep.subr.bf16.mxu0 0
        %428 = vmatpush1.bf16.msra.mxu0 0
        %429 = vmatprep.subr.bf16.mxu0 0
        %430 = vmatpush1.bf16.msra.mxu0 0
        %431 = vmatprep.mubr.bf16.mxu0 0
        %432 = vmatmul.mubr.bf16.gmra.mrb[0].mxu0 %v393
        %v433 = vpop.f32.mrb[0].mxu0
        %v434 = vadd.f32 0.0, %v433
        %v435 = vpop.f32.mrb[0].mxu0
        %v436 = vpop.f32.mrb[0].mxu0
        %v437 = vpop.f32.mrb[0].mxu0
        %438 = vdwg.mxu0
        %v439 = vpack.c.bf16 %v434, %v434
        %vm440 = vcmask 60416
        %441 = vst.msk [vmem:[%s324] sm:$0xf] %vm440, %v439
        %v443 = vunpack.c.l.b16 %v328
        %v444 = vpack.c.b16 %v443, %v443
        %445 = vrot.lane.b32.xlu0 %v444, 120
        %v446 = vpop.permute.xlu0 %445
        %v448 = vunpack.c.l.b16 %v329
        %v449 = vpack.c.b16 %v448, %v448
        %450 = vrot.lane.b32.xlu0 %v449, 120
        %v451 = vpop.permute.xlu0 %450
        %v453 = vsel %vm331, %v446, 0
        %v456 = vsel %vm331, %v451, 0
        %458 = vmatprep.subr.bf16.mxu0 0
        %459 = vmatpush1.bf16.xpose.msra.mxu0 %v456
        %460 = vmatprep.subr.bf16.mxu0 0
        %461 = vmatpush1.bf16.xpose.msra.mxu0 0
        %462 = vmatprep.subr.bf16.mxu0 0
        %463 = vmatpush1.bf16.xpose.msra.mxu0 0
        %464 = vmatprep.subr.bf16.mxu0 0
        %465 = vmatpush1.bf16.xpose.msra.mxu0 0
        %466 = vmatprep.subr.bf16.mxu0 0
        %467 = vmatpush1.bf16.xpose.msra.mxu0 0
        %468 = vmatprep.subr.bf16.mxu0 0
        %469 = vmatpush1.bf16.xpose.msra.mxu0 0
        %470 = vmatprep.subr.bf16.mxu0 0
        %471 = vmatpush1.bf16.xpose.msra.mxu0 0
        %472 = vmatprep.subr.bf16.mxu0 0
        %473 = vmatpush1.bf16.xpose.msra.mxu0 0
        %474 = vmatprep.subr.bf16.mxu0 0
        %475 = vmatpush1.bf16.xpose.msra.mxu0 0
        %476 = vmatprep.subr.bf16.mxu0 0
        %477 = vmatpush1.bf16.xpose.msra.mxu0 0
        %478 = vmatprep.subr.bf16.mxu0 0
        %479 = vmatpush1.bf16.xpose.msra.mxu0 0
        %480 = vmatprep.subr.bf16.mxu0 0
        %481 = vmatpush1.bf16.xpose.msra.mxu0 0
        %482 = vmatprep.subr.bf16.mxu0 0
        %483 = vmatpush1.bf16.xpose.msra.mxu0 0
        %484 = vmatprep.subr.bf16.mxu0 0
        %485 = vmatpush1.bf16.xpose.msra.mxu0 0
        %486 = vmatprep.subr.bf16.mxu0 0
        %487 = vmatpush1.bf16.xpose.msra.mxu0 0
        %488 = vmatprep.subr.bf16.mxu0 0
        %489 = vmatpush1.bf16.xpose.msra.mxu0 0
        %490 = vmatprep.mubr.bf16.mxu0 0
        %491 = vmatmul.mubr.bf16.gmra.mrb[0].mxu0 %v453
        %v492 = vpop.f32.mrb[0].mxu0
        %v493 = vadd.f32 0.0, %v492
        %v494 = vpop.f32.mrb[0].mxu0
        %v495 = vpop.f32.mrb[0].mxu0
        %v496 = vpop.f32.mrb[0].mxu0
        %497 = vdwg.mxu0
        %v498 = vmul.f32 %v493, 0.35355338
        %v499 = vsel %vm331, %v498, -inf
        %500 = vmax.xlane.f32.xlu0 %v499
        %v501 = vpop.xlane.xlu0 %500
        %v502 = vsub.f32 %v498, %v501
        %v503 = vmul.f32 %v502, 1.442695
        %v504 = vpow.pop %v503
        %v505 = vsel %vm331, %v504, 0.0
        %506 = vadd.xlane.f32.xlu0 %v505
        %v507 = vpop.xlane.xlu0 %506
        %v508 = vrcp.pop %v507
        %v509 = vmul.f32 %v504, %v508
        %s510 = scalar_lea.vmem %s288, 8 [#allocation2]
        %511 = vst.msk [vmem:[%s510] sm:$0xff] %vm331, %v509
        %v512 = vpack.c.bf16 %v509, %v509
        %v514 = vunpack.c.l.b16 %v330
        %v515 = vpack.c.b16 %v514, %v514
        %516 = vrot.lane.b32.xlu0 %v515, 120
        %v517 = vpop.permute.xlu0 %516
        %v519 = vsel %vm331, %v512, 0
        %v522 = vsel %vm395, %v517, 0
        %524 = vmatprep.subr.bf16.mxu0 0
        %525 = vmatpush1.bf16.msra.mxu0 %v522
        %526 = vmatprep.subr.bf16.mxu0 0
        %527 = vmatpush1.bf16.msra.mxu0 0
        %528 = vmatprep.subr.bf16.mxu0 0
        %529 = vmatpush1.bf16.msra.mxu0 0
        %530 = vmatprep.subr.bf16.mxu0 0
        %531 = vmatpush1.bf16.msra.mxu0 0
        %532 = vmatprep.subr.bf16.mxu0 0
        %533 = vmatpush1.bf16.msra.mxu0 0
        %534 = vmatprep.subr.bf16.mxu0 0
        %535 = vmatpush1.bf16.msra.mxu0 0
        %536 = vmatprep.subr.bf16.mxu0 0
        %537 = vmatpush1.bf16.msra.mxu0 0
        %538 = vmatprep.subr.bf16.mxu0 0
        %539 = vmatpush1.bf16.msra.mxu0 0
        %540 = vmatprep.subr.bf16.mxu0 0
        %541 = vmatpush1.bf16.msra.mxu0 0
        %542 = vmatprep.subr.bf16.mxu0 0
        %543 = vmatpush1.bf16.msra.mxu0 0
        %544 = vmatprep.subr.bf16.mxu0 0
        %545 = vmatpush1.bf16.msra.mxu0 0
        %546 = vmatprep.subr.bf16.mxu0 0
        %547 = vmatpush1.bf16.msra.mxu0 0
        %548 = vmatprep.subr.bf16.mxu0 0
        %549 = vmatpush1.bf16.msra.mxu0 0
        %550 = vmatprep.subr.bf16.mxu0 0
        %551 = vmatpush1.bf16.msra.mxu0 0
        %552 = vmatprep.subr.bf16.mxu0 0
        %553 = vmatpush1.bf16.msra.mxu0 0
        %554 = vmatprep.subr.bf16.mxu0 0
        %555 = vmatpush1.bf16.msra.mxu0 0
        %556 = vmatprep.mubr.bf16.mxu0 0
        %557 = vmatmul.mubr.bf16.gmra.mrb[0].mxu0 %v519
        %v558 = vpop.f32.mrb[0].mxu0
        %v559 = vadd.f32 0.0, %v558
        %v560 = vpop.f32.mrb[0].mxu0
        %v561 = vpop.f32.mrb[0].mxu0
        %v562 = vpop.f32.mrb[0].mxu0
        %563 = vdwg.mxu0
        %v564 = vpack.c.bf16 %v559, %v559
        %s565 = scalar_lea.vmem %s324, 4
        %566 = vst.msk [vmem:[%s565] sm:$0xf] %vm440, %v564
        %567 = vrot.lane.b32.xlu0 %v444, 112
        %v568 = vpop.permute.xlu0 %567
        %569 = vrot.lane.b32.xlu0 %v449, 112
        %v570 = vpop.permute.xlu0 %569
        %v572 = vsel %vm331, %v568, 0
        %v575 = vsel %vm331, %v570, 0
        %577 = vmatprep.subr.bf16.mxu0 0
        %578 = vmatpush1.bf16.xpose.msra.mxu0 %v575
        %579 = vmatprep.subr.bf16.mxu0 0
        %580 = vmatpush1.bf16.xpose.msra.mxu0 0
        %581 = vmatprep.subr.bf16.mxu0 0
        %582 = vmatpush1.bf16.xpose.msra.mxu0 0
        %583 = vmatprep.subr.bf16.mxu0 0
        %584 = vmatpush1.bf16.xpose.msra.mxu0 0
        %585 = vmatprep.subr.bf16.mxu0 0
        %586 = vmatpush1.bf16.xpose.msra.mxu0 0
        %587 = vmatprep.subr.bf16.mxu0 0
        %588 = vmatpush1.bf16.xpose.msra.mxu0 0
        %589 = vmatprep.subr.bf16.mxu0 0
        %590 = vmatpush1.bf16.xpose.msra.mxu0 0
        %591 = vmatprep.subr.bf16.mxu0 0
        %592 = vmatpush1.bf16.xpose.msra.mxu0 0
        %593 = vmatprep.subr.bf16.mxu0 0
        %594 = vmatpush1.bf16.xpose.msra.mxu0 0
        %595 = vmatprep.subr.bf16.mxu0 0
        %596 = vmatpush1.bf16.xpose.msra.mxu0 0
        %597 = vmatprep.subr.bf16.mxu0 0
        %598 = vmatpush1.bf16.xpose.msra.mxu0 0
        %599 = vmatprep.subr.bf16.mxu0 0
        %600 = vmatpush1.bf16.xpose.msra.mxu0 0
        %601 = vmatprep.subr.bf16.mxu0 0
        %602 = vmatpush1.bf16.xpose.msra.mxu0 0
        %603 = vmatprep.subr.bf16.mxu0 0
        %604 = vmatpush1.bf16.xpose.msra.mxu0 0
        %605 = vmatprep.subr.bf16.mxu0 0
        %606 = vmatpush1.bf16.xpose.msra.mxu0 0
        %607 = vmatprep.subr.bf16.mxu0 0
        %608 = vmatpush1.bf16.xpose.msra.mxu0 0
        %609 = vmatprep.mubr.bf16.mxu0 0
        %610 = vmatmul.mubr.bf16.gmra.mrb[0].mxu0 %v572
        %v611 = vpop.f32.mrb[0].mxu0
        %v612 = vadd.f32 0.0, %v611
        %v613 = vpop.f32.mrb[0].mxu0
        %v614 = vpop.f32.mrb[0].mxu0
        %v615 = vpop.f32.mrb[0].mxu0
        %616 = vdwg.mxu0
        %v617 = vmul.f32 %v612, 0.35355338
        %v618 = vsel %vm331, %v617, -inf
        %619 = vmax.xlane.f32.xlu0 %v618
        %v620 = vpop.xlane.xlu0 %619
        %v621 = vsub.f32 %v617, %v620
        %v622 = vmul.f32 %v621, 1.442695
        %v623 = vpow.pop %v622
        %v624 = vsel %vm331, %v623, 0.0
        %625 = vadd.xlane.f32.xlu0 %v624
        %v626 = vpop.xlane.xlu0 %625
        %v627 = vrcp.pop %v626
        %v628 = vmul.f32 %v623, %v627
        %s629 = scalar_lea.vmem %s288, 16 [#allocation2]
        %630 = vst.msk [vmem:[%s629] sm:$0xff] %vm331, %v628
        %v631 = vpack.c.bf16 %v628, %v628
        %632 = vrot.lane.b32.xlu0 %v515, 112
        %v633 = vpop.permute.xlu0 %632
        %v635 = vsel %vm331, %v631, 0
        %v638 = vsel %vm395, %v633, 0
        %640 = vmatprep.subr.bf16.mxu0 0
        %641 = vmatpush1.bf16.msra.mxu0 %v638
        %642 = vmatprep.subr.bf16.mxu0 0
        %643 = vmatpush1.bf16.msra.mxu0 0
        %644 = vmatprep.subr.bf16.mxu0 0
        %645 = vmatpush1.bf16.msra.mxu0 0
        %646 = vmatprep.subr.bf16.mxu0 0
        %647 = vmatpush1.bf16.msra.mxu0 0
        %648 = vmatprep.subr.bf16.mxu0 0
        %649 = vmatpush1.bf16.msra.mxu0 0
        %650 = vmatprep.subr.bf16.mxu0 0
        %651 = vmatpush1.bf16.msra.mxu0 0
        %652 = vmatprep.subr.bf16.mxu0 0
        %653 = vmatpush1.bf16.msra.mxu0 0
        %654 = vmatprep.subr.bf16.mxu0 0
        %655 = vmatpush1.bf16.msra.mxu0 0
        %656 = vmatprep.subr.bf16.mxu0 0
        %657 = vmatpush1.bf16.msra.mxu0 0
        %658 = vmatprep.subr.bf16.mxu0 0
        %659 = vmatpush1.bf16.msra.mxu0 0
        %660 = vmatprep.subr.bf16.mxu0 0
        %661 = vmatpush1.bf16.msra.mxu0 0
        %662 = vmatprep.subr.bf16.mxu0 0
        %663 = vmatpush1.bf16.msra.mxu0 0
        %664 = vmatprep.subr.bf16.mxu0 0
        %665 = vmatpush1.bf16.msra.mxu0 0
        %666 = vmatprep.subr.bf16.mxu0 0
        %667 = vmatpush1.bf16.msra.mxu0 0
        %668 = vmatprep.subr.bf16.mxu0 0
        %669 = vmatpush1.bf16.msra.mxu0 0
        %670 = vmatprep.subr.bf16.mxu0 0
        %671 = vmatpush1.bf16.msra.mxu0 0
        %672 = vmatprep.mubr.bf16.mxu0 0
        %673 = vmatmul.mubr.bf16.gmra.mrb[0].mxu0 %v635
        %v674 = vpop.f32.mrb[0].mxu0
        %v675 = vadd.f32 0.0, %v674
        %v676 = vpop.f32.mrb[0].mxu0
        %v677 = vpop.f32.mrb[0].mxu0
        %v678 = vpop.f32.mrb[0].mxu0
        %679 = vdwg.mxu0
        %v680 = vpack.c.bf16 %v675, %v675
        %s681 = scalar_lea.vmem %s324, 8
        %682 = vst.msk [vmem:[%s681] sm:$0xf] %vm440, %v680
        %683 = vrot.lane.b32.xlu0 %v444, 104
        %v684 = vpop.permute.xlu0 %683
        %685 = vrot.lane.b32.xlu0 %v449, 104
        %v686 = vpop.permute.xlu0 %685
        %v688 = vsel %vm331, %v684, 0
        %v691 = vsel %vm331, %v686, 0
        %693 = vmatprep.subr.bf16.mxu0 0
        %694 = vmatpush1.bf16.xpose.msra.mxu0 %v691
        %695 = vmatprep.subr.bf16.mxu0 0
        %696 = vmatpush1.bf16.xpose.msra.mxu0 0
        %697 = vmatprep.subr.bf16.mxu0 0
        %698 = vmatpush1.bf16.xpose.msra.mxu0 0
        %699 = vmatprep.subr.bf16.mxu0 0
        %700 = vmatpush1.bf16.xpose.msra.mxu0 0
        %701 = vmatprep.subr.bf16.mxu0 0
        %702 = vmatpush1.bf16.xpose.msra.mxu0 0
        %703 = vmatprep.subr.bf16.mxu0 0
        %704 = vmatpush1.bf16.xpose.msra.mxu0 0
        %705 = vmatprep.subr.bf16.mxu0 0
        %706 = vmatpush1.bf16.xpose.msra.mxu0 0
        %707 = vmatprep.subr.bf16.mxu0 0
        %708 = vmatpush1.bf16.xpose.msra.mxu0 0
        %709 = vmatprep.subr.bf16.mxu0 0
        %710 = vmatpush1.bf16.xpose.msra.mxu0 0
        %711 = vmatprep.subr.bf16.mxu0 0
        %712 = vmatpush1.bf16.xpose.msra.mxu0 0
        %713 = vmatprep.subr.bf16.mxu0 0
        %714 = vmatpush1.bf16.xpose.msra.mxu0 0
        %715 = vmatprep.subr.bf16.mxu0 0
        %716 = vmatpush1.bf16.xpose.msra.mxu0 0
        %717 = vmatprep.subr.bf16.mxu0 0
        %718 = vmatpush1.bf16.xpose.msra.mxu0 0
        %719 = vmatprep.subr.bf16.mxu0 0
        %720 = vmatpush1.bf16.xpose.msra.mxu0 0
        %721 = vmatprep.subr.bf16.mxu0 0
        %722 = vmatpush1.bf16.xpose.msra.mxu0 0
        %723 = vmatprep.subr.bf16.mxu0 0
        %724 = vmatpush1.bf16.xpose.msra.mxu0 0
        %725 = vmatprep.mubr.bf16.mxu0 0
        %726 = vmatmul.mubr.bf16.gmra.mrb[0].mxu0 %v688
        %v727 = vpop.f32.mrb[0].mxu0
        %v728 = vadd.f32 0.0, %v727
        %v729 = vpop.f32.mrb[0].mxu0
        %v730 = vpop.f32.mrb[0].mxu0
        %v731 = vpop.f32.mrb[0].mxu0
        %732 = vdwg.mxu0
        %v733 = vmul.f32 %v728, 0.35355338
        %v734 = vsel %vm331, %v733, -inf
        %735 = vmax.xlane.f32.xlu0 %v734
        %v736 = vpop.xlane.xlu0 %735
        %v737 = vsub.f32 %v733, %v736
        %v738 = vmul.f32 %v737, 1.442695
        %v739 = vpow.pop %v738
        %v740 = vsel %vm331, %v739, 0.0
        %741 = vadd.xlane.f32.xlu0 %v740
        %v742 = vpop.xlane.xlu0 %741
        %v743 = vrcp.pop %v742
        %v744 = vmul.f32 %v739, %v743
        %s745 = scalar_lea.vmem %s288, 24 [#allocation2]
        %746 = vst.msk [vmem:[%s745] sm:$0xff] %vm331, %v744
        %v747 = vpack.c.bf16 %v744, %v744
        %748 = vrot.lane.b32.xlu0 %v515, 104
        %v749 = vpop.permute.xlu0 %748
        %v751 = vsel %vm331, %v747, 0
        %v754 = vsel %vm395, %v749, 0
        %756 = vmatprep.subr.bf16.mxu0 0
        %757 = vmatpush1.bf16.msra.mxu0 %v754
        %758 = vmatprep.subr.bf16.mxu0 0
        %759 = vmatpush1.bf16.msra.mxu0 0
        %760 = vmatprep.subr.bf16.mxu0 0
        %761 = vmatpush1.bf16.msra.mxu0 0
        %762 = vmatprep.subr.bf16.mxu0 0
        %763 = vmatpush1.bf16.msra.mxu0 0
        %764 = vmatprep.subr.bf16.mxu0 0
        %765 = vmatpush1.bf16.msra.mxu0 0
        %766 = vmatprep.subr.bf16.mxu0 0
        %767 = vmatpush1.bf16.msra.mxu0 0
        %768 = vmatprep.subr.bf16.mxu0 0
        %769 = vmatpush1.bf16.msra.mxu0 0
        %770 = vmatprep.subr.bf16.mxu0 0
        %771 = vmatpush1.bf16.msra.mxu0 0
        %772 = vmatprep.subr.bf16.mxu0 0
        %773 = vmatpush1.bf16.msra.mxu0 0
        %774 = vmatprep.subr.bf16.mxu0 0
        %775 = vmatpush1.bf16.msra.mxu0 0
        %776 = vmatprep.subr.bf16.mxu0 0
        %777 = vmatpush1.bf16.msra.mxu0 0
        %778 = vmatprep.subr.bf16.mxu0 0
        %779 = vmatpush1.bf16.msra.mxu0 0
        %780 = vmatprep.subr.bf16.mxu0 0
        %781 = vmatpush1.bf16.msra.mxu0 0
        %782 = vmatprep.subr.bf16.mxu0 0
        %783 = vmatpush1.bf16.msra.mxu0 0
        %784 = vmatprep.subr.bf16.mxu0 0
        %785 = vmatpush1.bf16.msra.mxu0 0
        %786 = vmatprep.subr.bf16.mxu0 0
        %787 = vmatpush1.bf16.msra.mxu0 0
        %788 = vmatprep.mubr.bf16.mxu0 0
        %789 = vmatmul.mubr.bf16.gmra.mrb[0].mxu0 %v751
        %v790 = vpop.f32.mrb[0].mxu0
        %v791 = vadd.f32 0.0, %v790
        %v792 = vpop.f32.mrb[0].mxu0
        %v793 = vpop.f32.mrb[0].mxu0
        %v794 = vpop.f32.mrb[0].mxu0
        %795 = vdwg.mxu0
        %v796 = vpack.c.bf16 %v791, %v791
        %s797 = scalar_lea.vmem %s324, 12
        %798 = vst.msk [vmem:[%s797] sm:$0xf] %vm440, %v796
        %s799 = smul.u32 4, %s25
        %p800 = scmp.lt.s32.totalorder %s24, 1
        %s801 = scalar_select %p800, %s24, 1
        %p802 = scmp.lt.s32.totalorder %s799, 3
        %s803 = scalar_select %p802, %s799, 3
        %p804 = scmp.lt.s32.totalorder %s26, 0
        %s805 = scalar_select %p804, %s26, 0
        %s806 = sadd.s32 %s805, %s803
        %s807 = smul.addr %s801, 4
        %s808 = sadd.s32 %s806, %s807
        %s809 = smul.addr %s808, 4
        %s810 = scalar_lea.vmem %s3, %s809
        %s811 = sand.u32 %s166, 1
        %s812 = scalar_lea.sflag [#allocation3], %s811
        %s813 = sand.u32 %s166, 1
        %s814 = smul.addr %s813, 32
        %s815 = scalar_lea.vmem [#allocation2], %s814
        // Predicated region
        $region33: #{mha_forward.4} parent=31 // pred_check
          %p816 = pneg %p146
        $region34: #{mha_forward.4} parent=31 // pred_check_branch
          %818 = sbr.rel (%p816) target = $region36
        $region35: #{mha_forward.4} parent=31 // pred_region
          %s819 = smul.u32 4, %s25
        $region36: #{mha_forward.4} parent=31 // pred_fallthru
          _
        // Predicated region
        $region37: #{mha_forward.4} parent=31 // pred_check
          %p820 = pneg %p176
        $region38: #{mha_forward.4} parent=31 // pred_check_branch
          %822 = sbr.rel (%p820) target = $region40
        $region39: #{mha_forward.4} parent=31 // pred_region
          %s823 = smul.u32 4, %s25
          %s825 = ssub.s32 512, 512
          %826 = vsyncadd %s812, %s825
          %s827 = sadd.s32 %s26, %s823
          %s828 = smul.addr %s24, 4
          %s829 = sadd.s32 %s827, %s828
          %s830 = smul.addr %s829, 128
          %s831 = scalar_lea.hbm %s4, %s830
          %s832 = sshll.u32 %s815, 4
          %s833 = int_to_ptr.vmem [resolvable:$true] %s832
          %838 = dma.vmem_to_hbm [thread:$0]  %s833, 512, %s831, %s812, 128, 128, 8
        $region40: #{mha_forward.4} parent=31 // pred_fallthru
          _
      $region32: #{mha_forward.4} parent=5 // pred_fallthru
        _
      %p839 = scmp.le.s32.totalorder 2, %s14
      // Predicated region
      $region41: #{mha_forward.4} parent=5 // pred_check
        %p840 = pneg %p839
      $region42: #{mha_forward.4} parent=5 // pred_check_branch
        %842 = sbr.rel (%p840) target = $region44
      $region43: #{mha_forward.4} parent=5 // pred_region
        %s843 = ssub.s32 %s14, 2
        // Predicated region
        $region45: #{mha_forward.4} parent=43 // pred_check
          %p844 = pneg %p152
        $region46: #{mha_forward.4} parent=43 // pred_check_branch
          %846 = sbr.rel (%p844) target = $region48
        $region47: #{mha_forward.4} parent=43 // pred_region
          %s847 = smul.u32 4, %s28
          %p848 = scmp.lt.s32.totalorder %s27, 1
          %s849 = scalar_select %p848, %s27, 1
          %p850 = scmp.lt.s32.totalorder %s847, 3
          %s851 = scalar_select %p850, %s847, 3
          %p852 = scmp.lt.s32.totalorder %s29, 0
          %s853 = scalar_select %p852, %s29, 0
          %s854 = sadd.s32 %s853, %s851
          %s855 = smul.addr %s849, 4
          %s856 = sadd.s32 %s854, %s855
          %s857 = smul.addr %s856, 4
          %s858 = scalar_lea.vmem %s3, %s857
        $region48: #{mha_forward.4} parent=43 // pred_fallthru
          _
        // Predicated region
        $region49: #{mha_forward.4} parent=43 // pred_check
          %p859 = pneg %p182
        $region50: #{mha_forward.4} parent=43 // pred_check_branch
          %861 = sbr.rel (%p859) target = $region52
        $region51: #{mha_forward.4} parent=43 // pred_region
          %s862 = sand.u32 %s167, 1
          %s863 = scalar_lea.sflag [#allocation3], %s862
          %s864 = sand.u32 %s167, 1
          %s865 = smul.addr %s864, 32
          %s866 = scalar_lea.vmem [#allocation2], %s865
          %867 = dma.done %s863, 512
        $region52: #{mha_forward.4} parent=43 // pred_fallthru
          _
      $region44: #{mha_forward.4} parent=5 // pred_fallthru
        _
    $region6: #{mha_forward.4} parent=1 // loop_footer
      %s18 = sadd.s32 1, %s14
    $region7: #{mha_forward.4} parent=1 // loop_footer_branch
      %13 = sbr.rel target = $region3
    $region8: #{mha_forward.4} parent=1 // loop_exit
      _
    %868 = vsyncpa [#allocation3], 1
    %s869 = scalar_lea.sflag [#allocation3], 1
    %870 = vsyncpa %s869, 1

</llo_original>
